<compile_context>
chip_gen: v7x
topology: tpu7x:2x2x1
jax: 0.10.0
libtpu: 0.0.40
codegen_flags: <defaults>
</compile_context>

<pallas_src>
import functools

import jax
import jax.numpy as jnp
from jax.experimental import pallas as pl
from jax.experimental.pallas import tpu as pltpu

LN_EPS = 1e-5


def _patch_merger_kernel(x_ref, q_ref, g_ref, b_ref, w_ref, o_ref, *,
                         block_b, seq_len, scale):
    # x_ref: (Bt*L, C)   q_ref: (L_out, C)   g_ref/b_ref: (1, C)
    # w_ref: (C, 2C)     o_ref: (Bt*L_out, 2C)
    x = x_ref[...].astype(jnp.float32)                       # (Bt*L, C)

    # --- LayerNorm over channels, flattened across the fused batch tile (f32) ---
    mean = jnp.mean(x, axis=-1, keepdims=True)
    cent = x - mean
    var = jnp.mean(cent * cent, axis=-1, keepdims=True)
    xn = cent * jax.lax.rsqrt(var + LN_EPS)
    xn = xn * g_ref[...] + b_ref[...]                        # (Bt*L, C), f32

    # MXU operands narrowed to bf16; accumulation stays f32.
    # Scale folded into the small (L_out, C) queries tile instead of (L_out, L) sim.
    q_bf = (q_ref[...].astype(jnp.float32) * scale).astype(jnp.bfloat16)
    xn_bf = xn.astype(jnp.bfloat16)

    # Contract both operands over their last (C) axis -> no materialized transpose.
    nt_dims = (((1,), (1,)), ((), ()))

    # --- per-batch attention pooling (short, statically unrolled loop) ---
    pooled = []
    for b in range(block_b):
        xb = xn_bf[b * seq_len:(b + 1) * seq_len, :]         # (L, C), static slice
        sim = jax.lax.dot_general(q_bf, xb, nt_dims,
                                  preferred_element_type=jnp.float32)   # (L_out, L)
        m = jnp.max(sim, axis=-1, keepdims=True)
        p = jnp.exp(sim - m)
        attn = p * pl.reciprocal(jnp.sum(p, axis=-1, keepdims=True), approx=True)
        pooled.append(jnp.dot(attn.astype(jnp.bfloat16), xb,
                              preferred_element_type=jnp.float32))      # (L_out, C)
    pooled = jnp.concatenate(pooled, axis=0)                 # (Bt*L_out, C), f32

    # --- fused output projection for the whole batch tile (Linear, no bias) ---
    out = jnp.dot(pooled.astype(jnp.bfloat16),
                  w_ref[...].astype(jnp.bfloat16),
                  preferred_element_type=jnp.float32)        # (Bt*L_out, 2C)
    o_ref[...] = out.astype(o_ref.dtype)


def patch_merger(x, queries, ln_weight, ln_bias, lin_weight, *, block_b=None):
    """x: (B, L, C); queries: (L_out, C); ln_*: (C,); lin_weight: (2C, C) (PyTorch layout)."""
    B, L, C = x.shape
    L_out = queries.shape[0]
    C2 = lin_weight.shape[0]                                 # 2*C
    scale = float(C) ** -0.5

    if block_b is None:
        # Fuse as many batch elements as possible per grid step (bigger MXU M dims,
        # bigger DMA tiles), but keep a 2-wide "parallel" axis when B allows so the
        # grid can shard across v7x's two TensorCores.
        block_b = B // 2 if (B % 2 == 0 and B > 1) else B
    assert B % block_b == 0, "block_b must divide batch"
    num_blocks = B // block_b

    # Wrapper-side layout plumbing (free row-major reshapes).
    x_flat = x.reshape(num_blocks, block_b * L, C)
    gamma = ln_weight.reshape(1, C)
    beta = ln_bias.reshape(1, C)
    w_t = lin_weight.T                                       # (C, 2C): out = pooled @ w_t

    kernel = functools.partial(_patch_merger_kernel,
                               block_b=block_b, seq_len=L, scale=scale)

    out_flat = pl.pallas_call(
        kernel,
        out_shape=jax.ShapeDtypeStruct((num_blocks, block_b * L_out, C2), x.dtype),
        grid_spec=pltpu.PrefetchScalarGridSpec(
            num_scalar_prefetch=0,
            grid=(num_blocks,),
            in_specs=[
                pl.BlockSpec((pl.Squeezed(), block_b * L, C),
                             lambda g: (g, 0, 0)),           # x (fused batch tile)
                pl.BlockSpec((L_out, C), lambda g: (0, 0)),  # queries
                pl.BlockSpec((1, C), lambda g: (0, 0)),      # LN gamma
                pl.BlockSpec((1, C), lambda g: (0, 0)),      # LN beta
                pl.BlockSpec((C, C2), lambda g: (0, 0)),     # linear weight^T
            ],
            out_specs=pl.BlockSpec((pl.Squeezed(), block_b * L_out, C2),
                                   lambda g: (g, 0, 0)),
        ),
        compiler_params=pltpu.CompilerParams(
            dimension_semantics=("parallel",)),
    )(x_flat, queries, gamma, beta, w_t)

    return out_flat.reshape(B, L_out, C2)


def _reference(x, queries, ln_weight, ln_bias, lin_weight):
    C = x.shape[-1]
    mean = jnp.mean(x, axis=-1, keepdims=True)
    var = jnp.mean((x - mean) ** 2, axis=-1, keepdims=True)
    xn = (x - mean) / jnp.sqrt(var + LN_EPS) * ln_weight + ln_bias
    sim = jnp.einsum("qc,blc->bql", queries, xn) * (C ** -0.5)
    attn = jax.nn.softmax(sim, axis=-1)
    pooled = jnp.einsum("bql,blc->bqc", attn, xn)
    return jnp.einsum("bqc,oc->bqo", pooled, lin_weight)


if __name__ == "__main__":
    # Module config: input_resolution = (8, 8), dim = 64
    H, W, C = 8, 8, 64
    L = H * W                   # 64 tokens in
    L_out = L // 4              # 16 tokens out
    B = 8                       # fused into 2 grid steps of 4 batch elements each

    key = jax.random.PRNGKey(0)
    k_x, k_q, k_w = jax.random.split(key, 3)

    x = jax.random.normal(k_x, (B, L, C), dtype=jnp.float32)
    queries = jax.random.normal(k_q, (L_out, C), dtype=jnp.float32)       # nn.Parameter(randn)
    ln_weight = jnp.ones((C,), dtype=jnp.float32)                         # LayerNorm default init
    ln_bias = jnp.zeros((C,), dtype=jnp.float32)
    lin_weight = jax.random.normal(k_w, (2 * C, C), dtype=jnp.float32) * (C ** -0.5)

    out = patch_merger(x, queries, ln_weight, ln_bias, lin_weight)
    out = jax.block_until_ready(out)

    ref = _reference(x, queries, ln_weight, ln_bias, lin_weight)
    assert out.shape == (B, L_out, 2 * C)
    # bf16 MXU operands + approx reciprocal -> relaxed tolerance vs the f32 reference.
    max_err = float(jnp.max(jnp.abs(out - ref)))
    assert jnp.allclose(out, ref, atol=3e-2, rtol=3e-2), (
        f"mismatch vs reference, max abs err {max_err}")

    print("KERNEL_OK")
</pallas_src>

<mosaic_0001>
module attributes {stable_mosaic.version = 11 : i64} {
  func.func @_patch_merger_kernel(%arg0: i32, %arg1: memref<1x256x64xf32, #tpu.memory_space<vmem>>, %arg2: memref<16x64xf32, #tpu.memory_space<vmem>>, %arg3: memref<1x64xf32, #tpu.memory_space<vmem>>, %arg4: memref<1x64xf32, #tpu.memory_space<vmem>>, %arg5: memref<64x128xf32, #tpu.memory_space<vmem>>, %arg6: memref<1x64x128xf32, #tpu.memory_space<vmem>>) attributes {dimension_semantics = [#tpu.dimension_semantics<parallel>], iteration_bounds = array<i64: 2>, scalar_prefetch = 0 : i64, scratch_operands = 0 : i64, tpu.core_type = #tpu.core_type<tc>, window_params = [{transform_indices = @transform_0, window_bounds = array<i64: 1, 256, 64>}, {pipeline_mode = #tpu.pipeline_mode<synchronous>, transform_indices = @transform_1, window_bounds = array<i64: 16, 64>}, {pipeline_mode = #tpu.pipeline_mode<synchronous>, transform_indices = @transform_2, window_bounds = array<i64: 1, 64>}, {pipeline_mode = #tpu.pipeline_mode<synchronous>, transform_indices = @transform_3, window_bounds = array<i64: 1, 64>}, {pipeline_mode = #tpu.pipeline_mode<synchronous>, transform_indices = @transform_4, window_bounds = array<i64: 64, 128>}, {transform_indices = @transform_5, window_bounds = array<i64: 1, 64, 128>}]} {
    %c0 = arith.constant 0 : index
    %c0_0 = arith.constant 0 : index
    %c0_1 = arith.constant 0 : index
    %0 = vector.load %arg1[%c0, %c0_0, %c0_1] : memref<1x256x64xf32, #tpu.memory_space<vmem>>, vector<1x256x64xf32>
    %1 = vector.shape_cast %0 : vector<1x256x64xf32> to vector<256x64xf32>
    %cst = arith.constant dense<0.000000e+00> : vector<256xf32>
    %2 = vector.multi_reduction <add>, %1, %cst [1] : vector<256x64xf32> to vector<256xf32>
    %3 = vector.shape_cast %2 : vector<256xf32> to vector<256x1xf32>
    %cst_2 = arith.constant 6.400000e+01 : f32
    %4 = vector.broadcast %cst_2 : f32 to vector<256x1xf32>
    %5 = arith.divf %3, %4 : vector<256x1xf32>
    %6 = vector.broadcast %5 : vector<256x1xf32> to vector<256x64xf32>
    %7 = arith.subf %1, %6 : vector<256x64xf32>
    %8 = arith.mulf %7, %7 : vector<256x64xf32>
    %cst_3 = arith.constant dense<0.000000e+00> : vector<256xf32>
    %9 = vector.multi_reduction <add>, %8, %cst_3 [1] : vector<256x64xf32> to vector<256xf32>
    %10 = vector.shape_cast %9 : vector<256xf32> to vector<256x1xf32>
    %cst_4 = arith.constant 6.400000e+01 : f32
    %11 = vector.broadcast %cst_4 : f32 to vector<256x1xf32>
    %12 = arith.divf %10, %11 : vector<256x1xf32>
    %cst_5 = arith.constant 9.99999974E-6 : f32
    %13 = vector.broadcast %cst_5 : f32 to vector<256x1xf32>
    %14 = arith.addf %12, %13 : vector<256x1xf32>
    %15 = math.rsqrt %14 : vector<256x1xf32>
    %16 = vector.broadcast %15 : vector<256x1xf32> to vector<256x64xf32>
    %17 = arith.mulf %7, %16 : vector<256x64xf32>
    %c0_6 = arith.constant 0 : index
    %c0_7 = arith.constant 0 : index
    %18 = vector.load %arg3[%c0_6, %c0_7] : memref<1x64xf32, #tpu.memory_space<vmem>>, vector<1x64xf32>
    %19 = vector.broadcast %18 : vector<1x64xf32> to vector<256x64xf32>
    %20 = arith.mulf %17, %19 : vector<256x64xf32>
    %c0_8 = arith.constant 0 : index
    %c0_9 = arith.constant 0 : index
    %21 = vector.load %arg4[%c0_8, %c0_9] : memref<1x64xf32, #tpu.memory_space<vmem>>, vector<1x64xf32>
    %22 = vector.broadcast %21 : vector<1x64xf32> to vector<256x64xf32>
    %23 = arith.addf %20, %22 : vector<256x64xf32>
    %c0_10 = arith.constant 0 : index
    %c0_11 = arith.constant 0 : index
    %24 = vector.load %arg2[%c0_10, %c0_11] : memref<16x64xf32, #tpu.memory_space<vmem>>, vector<16x64xf32>
    %cst_12 = arith.constant 1.250000e-01 : f32
    %25 = vector.broadcast %cst_12 : f32 to vector<16x64xf32>
    %26 = arith.mulf %24, %25 : vector<16x64xf32>
    %27 = arith.truncf %26 : vector<16x64xf32> to vector<16x64xbf16>
    %28 = arith.truncf %23 : vector<256x64xf32> to vector<256x64xbf16>
    %29 = vector.extract_strided_slice %28 {offsets = [0, 0], sizes = [64, 64], strides = [1, 1]} : vector<256x64xbf16> to vector<64x64xbf16>
    %cst_13 = arith.constant dense<0.000000e+00> : vector<16x64xf32>
    %30 = tpu.matmul %27, %29, %cst_13 {dimension_numbers = #tpu.dot_dimension_numbers<[1], [1], [0], [0], [0, 0, 1, 0], [], []>} : vector<16x64xbf16>, vector<64x64xbf16>, vector<16x64xf32> -> vector<16x64xf32>
    %cst_14 = arith.constant dense<0xFF800000> : vector<16xf32>
    %31 = vector.multi_reduction <maximumf>, %30, %cst_14 [1] : vector<16x64xf32> to vector<16xf32>
    %32 = vector.shape_cast %31 : vector<16xf32> to vector<16x1xf32>
    %33 = vector.broadcast %32 : vector<16x1xf32> to vector<16x64xf32>
    %34 = arith.subf %30, %33 : vector<16x64xf32>
    %35 = math.exp %34 : vector<16x64xf32>
    %cst_15 = arith.constant dense<0.000000e+00> : vector<16xf32>
    %36 = vector.multi_reduction <add>, %35, %cst_15 [1] : vector<16x64xf32> to vector<16xf32>
    %37 = vector.shape_cast %36 : vector<16xf32> to vector<16x1xf32>
    %38 = tpu.reciprocal %37 {approx = true} : vector<16x1xf32> -> vector<16x1xf32>
    %39 = vector.broadcast %38 : vector<16x1xf32> to vector<16x64xf32>
    %40 = arith.mulf %35, %39 : vector<16x64xf32>
    %41 = arith.truncf %40 : vector<16x64xf32> to vector<16x64xbf16>
    %cst_16 = arith.constant dense<0.000000e+00> : vector<16x64xf32>
    %42 = tpu.matmul %41, %29, %cst_16 {dimension_numbers = #tpu.dot_dimension_numbers<[1], [0], [0], [1], [0, 0, 1, 1], [], []>} : vector<16x64xbf16>, vector<64x64xbf16>, vector<16x64xf32> -> vector<16x64xf32>
    %43 = vector.extract_strided_slice %28 {offsets = [64, 0], sizes = [64, 64], strides = [1, 1]} : vector<256x64xbf16> to vector<64x64xbf16>
    %cst_17 = arith.constant dense<0.000000e+00> : vector<16x64xf32>
    %44 = tpu.matmul %27, %43, %cst_17 {dimension_numbers = #tpu.dot_dimension_numbers<[1], [1], [0], [0], [0, 0, 1, 0], [], []>} : vector<16x64xbf16>, vector<64x64xbf16>, vector<16x64xf32> -> vector<16x64xf32>
    %cst_18 = arith.constant dense<0xFF800000> : vector<16xf32>
    %45 = vector.multi_reduction <maximumf>, %44, %cst_18 [1] : vector<16x64xf32> to vector<16xf32>
    %46 = vector.shape_cast %45 : vector<16xf32> to vector<16x1xf32>
    %47 = vector.broadcast %46 : vector<16x1xf32> to vector<16x64xf32>
    %48 = arith.subf %44, %47 : vector<16x64xf32>
    %49 = math.exp %48 : vector<16x64xf32>
    %cst_19 = arith.constant dense<0.000000e+00> : vector<16xf32>
    %50 = vector.multi_reduction <add>, %49, %cst_19 [1] : vector<16x64xf32> to vector<16xf32>
    %51 = vector.shape_cast %50 : vector<16xf32> to vector<16x1xf32>
    %52 = tpu.reciprocal %51 {approx = true} : vector<16x1xf32> -> vector<16x1xf32>
    %53 = vector.broadcast %52 : vector<16x1xf32> to vector<16x64xf32>
    %54 = arith.mulf %49, %53 : vector<16x64xf32>
    %55 = arith.truncf %54 : vector<16x64xf32> to vector<16x64xbf16>
    %cst_20 = arith.constant dense<0.000000e+00> : vector<16x64xf32>
    %56 = tpu.matmul %55, %43, %cst_20 {dimension_numbers = #tpu.dot_dimension_numbers<[1], [0], [0], [1], [0, 0, 1, 1], [], []>} : vector<16x64xbf16>, vector<64x64xbf16>, vector<16x64xf32> -> vector<16x64xf32>
    %57 = vector.extract_strided_slice %28 {offsets = [128, 0], sizes = [64, 64], strides = [1, 1]} : vector<256x64xbf16> to vector<64x64xbf16>
    %cst_21 = arith.constant dense<0.000000e+00> : vector<16x64xf32>
    %58 = tpu.matmul %27, %57, %cst_21 {dimension_numbers = #tpu.dot_dimension_numbers<[1], [1], [0], [0], [0, 0, 1, 0], [], []>} : vector<16x64xbf16>, vector<64x64xbf16>, vector<16x64xf32> -> vector<16x64xf32>
    %cst_22 = arith.constant dense<0xFF800000> : vector<16xf32>
    %59 = vector.multi_reduction <maximumf>, %58, %cst_22 [1] : vector<16x64xf32> to vector<16xf32>
    %60 = vector.shape_cast %59 : vector<16xf32> to vector<16x1xf32>
    %61 = vector.broadcast %60 : vector<16x1xf32> to vector<16x64xf32>
    %62 = arith.subf %58, %61 : vector<16x64xf32>
    %63 = math.exp %62 : vector<16x64xf32>
    %cst_23 = arith.constant dense<0.000000e+00> : vector<16xf32>
    %64 = vector.multi_reduction <add>, %63, %cst_23 [1] : vector<16x64xf32> to vector<16xf32>
    %65 = vector.shape_cast %64 : vector<16xf32> to vector<16x1xf32>
    %66 = tpu.reciprocal %65 {approx = true} : vector<16x1xf32> -> vector<16x1xf32>
    %67 = vector.broadcast %66 : vector<16x1xf32> to vector<16x64xf32>
    %68 = arith.mulf %63, %67 : vector<16x64xf32>
    %69 = arith.truncf %68 : vector<16x64xf32> to vector<16x64xbf16>
    %cst_24 = arith.constant dense<0.000000e+00> : vector<16x64xf32>
    %70 = tpu.matmul %69, %57, %cst_24 {dimension_numbers = #tpu.dot_dimension_numbers<[1], [0], [0], [1], [0, 0, 1, 1], [], []>} : vector<16x64xbf16>, vector<64x64xbf16>, vector<16x64xf32> -> vector<16x64xf32>
    %71 = vector.extract_strided_slice %28 {offsets = [192, 0], sizes = [64, 64], strides = [1, 1]} : vector<256x64xbf16> to vector<64x64xbf16>
    %cst_25 = arith.constant dense<0.000000e+00> : vector<16x64xf32>
    %72 = tpu.matmul %27, %71, %cst_25 {dimension_numbers = #tpu.dot_dimension_numbers<[1], [1], [0], [0], [0, 0, 1, 0], [], []>} : vector<16x64xbf16>, vector<64x64xbf16>, vector<16x64xf32> -> vector<16x64xf32>
    %cst_26 = arith.constant dense<0xFF800000> : vector<16xf32>
    %73 = vector.multi_reduction <maximumf>, %72, %cst_26 [1] : vector<16x64xf32> to vector<16xf32>
    %74 = vector.shape_cast %73 : vector<16xf32> to vector<16x1xf32>
    %75 = vector.broadcast %74 : vector<16x1xf32> to vector<16x64xf32>
    %76 = arith.subf %72, %75 : vector<16x64xf32>
    %77 = math.exp %76 : vector<16x64xf32>
    %cst_27 = arith.constant dense<0.000000e+00> : vector<16xf32>
    %78 = vector.multi_reduction <add>, %77, %cst_27 [1] : vector<16x64xf32> to vector<16xf32>
    %79 = vector.shape_cast %78 : vector<16xf32> to vector<16x1xf32>
    %80 = tpu.reciprocal %79 {approx = true} : vector<16x1xf32> -> vector<16x1xf32>
    %81 = vector.broadcast %80 : vector<16x1xf32> to vector<16x64xf32>
    %82 = arith.mulf %77, %81 : vector<16x64xf32>
    %83 = arith.truncf %82 : vector<16x64xf32> to vector<16x64xbf16>
    %cst_28 = arith.constant dense<0.000000e+00> : vector<16x64xf32>
    %84 = tpu.matmul %83, %71, %cst_28 {dimension_numbers = #tpu.dot_dimension_numbers<[1], [0], [0], [1], [0, 0, 1, 1], [], []>} : vector<16x64xbf16>, vector<64x64xbf16>, vector<16x64xf32> -> vector<16x64xf32>
    %85 = tpu.concatenate %42, %56, %70, %84 in 0 : vector<16x64xf32>, vector<16x64xf32>, vector<16x64xf32>, vector<16x64xf32> -> vector<64x64xf32>
    %86 = arith.truncf %85 : vector<64x64xf32> to vector<64x64xbf16>
    %c0_29 = arith.constant 0 : index
    %c0_30 = arith.constant 0 : index
    %87 = vector.load %arg5[%c0_29, %c0_30] : memref<64x128xf32, #tpu.memory_space<vmem>>, vector<64x128xf32>
    %88 = arith.truncf %87 : vector<64x128xf32> to vector<64x128xbf16>
    %cst_31 = arith.constant dense<0.000000e+00> : vector<64x128xf32>
    %89 = tpu.matmul %86, %88, %cst_31 {dimension_numbers = #tpu.dot_dimension_numbers<[1], [0], [0], [1], [0, 0, 1, 1], [], []>} : vector<64x64xbf16>, vector<64x128xbf16>, vector<64x128xf32> -> vector<64x128xf32>
    %c0_32 = arith.constant 0 : index
    %c0_33 = arith.constant 0 : index
    %c0_34 = arith.constant 0 : index
    %90 = vector.load %arg6[%c0_32, %c0_33, %c0_34] : memref<1x64x128xf32, #tpu.memory_space<vmem>>, vector<1x64x128xf32>
    %91 = vector.shape_cast %90 : vector<1x64x128xf32> to vector<64x128xf32>
    %92 = vector.shape_cast %89 : vector<64x128xf32> to vector<1x64x128xf32>
    tpu.vector_store %arg6[%c0_32, %c0_33, %c0_34], %92 {strides = array<i32>} : memref<1x64x128xf32, #tpu.memory_space<vmem>>, vector<1x64x128xf32>,
    return
  }
  func.func @transform_0(%arg0: i32) -> (i32, i32, i32) {
    %c0_i32 = arith.constant 0 : i32
    %c0_i32_0 = arith.constant 0 : i32
    %c0_i32_1 = arith.constant 0 : i32
    return %arg0, %c0_i32, %c0_i32_0 : i32, i32, i32
  }
  func.func @transform_1(%arg0: i32) -> (i32, i32) {
    %c0_i32 = arith.constant 0 : i32
    %c0_i32_0 = arith.constant 0 : i32
    %c0_i32_1 = arith.constant 0 : i32
    return %c0_i32, %c0_i32_0 : i32, i32
  }
  func.func @transform_2(%arg0: i32) -> (i32, i32) {
    %c0_i32 = arith.constant 0 : i32
    %c0_i32_0 = arith.constant 0 : i32
    %c0_i32_1 = arith.constant 0 : i32
    return %c0_i32, %c0_i32_0 : i32, i32
  }
  func.func @transform_3(%arg0: i32) -> (i32, i32) {
    %c0_i32 = arith.constant 0 : i32
    %c0_i32_0 = arith.constant 0 : i32
    %c0_i32_1 = arith.constant 0 : i32
    return %c0_i32, %c0_i32_0 : i32, i32
  }
  func.func @transform_4(%arg0: i32) -> (i32, i32) {
    %c0_i32 = arith.constant 0 : i32
    %c0_i32_0 = arith.constant 0 : i32
    %c0_i32_1 = arith.constant 0 : i32
    return %c0_i32, %c0_i32_0 : i32, i32
  }
  func.func @transform_5(%arg0: i32) -> (i32, i32, i32) {
    %c0_i32 = arith.constant 0 : i32
    %c0_i32_0 = arith.constant 0 : i32
    %c0_i32_1 = arith.constant 0 : i32
    return %arg0, %c0_i32, %c0_i32_0 : i32, i32, i32
  }
}

</mosaic_0001>

<llo_original>
// kernel: tpu_custom_call.1
$region0: #{tpu_custom_call.1}
  #allocation0 [shape = 'u32[]', space=smem, size = 0x4, offset = 0x4, fixed_abs, tag = 'smem constant byte address 0x4 - core index']
  #allocation1 [shape = 'u32[144,128]{1,0:T(1,128)}', space=vmem, size = 0x12000, scoped, tag = 'internal scratch']
  %s0 = inlined_call_operand.vmem [shape: f32[2,256,64], index: 0, kind: input, shape index: {}]
  %s1 = inlined_call_operand.vmem [shape: f32[16,64], index: 1, kind: input, shape index: {}]
  %s2 = inlined_call_operand.vmem [shape: f32[1,64], index: 2, kind: input, shape index: {}]
  %s3 = inlined_call_operand.vmem [shape: f32[1,64], index: 3, kind: input, shape index: {}]
  %s4 = inlined_call_operand.vmem [shape: f32[64,128], index: 4, kind: input, shape index: {}]
  %s5 = inlined_call_operand.hbm [shape: f32[2,64,128], index: 5, kind: output, shape index: {}]
  %s6 = sld [smem:[#allocation0]]
  $region53: #{tpu_custom_call.1} parent=0
    _
  %s8 = ssub.s32 1, %s6
  %s9 = scalar_select 0, %s8, %s6
  $region1: #{tpu_custom_call.1} parent=0
    #allocation2 [shape = 'u8[65536]{0}', space=vmem, size = 0x10000, scoped, tag = 'output window, operand 0']
    #allocation3 [shape = 's32[2]{0}', space=sflag, size = 0x8, scoped, tag = 'scoped memory for tpu_custom_call.1']
    %10 = vsyncpa [#allocation3], 0
    %s11 = scalar_lea.sflag [#allocation3], 1
    %12 = vsyncpa %s11, 0
    loop: start=0, step=1, limit=4
    $region2: #{tpu_custom_call.1} parent=1 // loop_pre_header
      _
    $region3: #{tpu_custom_call.1} parent=1 // loop_header
      %s14 = sphi 0, %s18
      %p15 = scmp.ge.s32.totalorder %s14, 4
      %s24 = sphi 0, %s26
      %s27 = sphi 0, %s24
      %s28 = sphi 0, %s27
      %s44 = sphi 0, %s28
      %s48 = sphi 0, %s48
      %s50 = sphi 0, %s48
      %s51 = sphi 0, %s50
      %s65 = sphi 0, %s51
      %s69 = sphi 0, %s69
      %s71 = sphi 0, %s69
      %s72 = sphi 0, %s71
      %s86 = sphi 0, %s72
      %s90 = sphi 0, %s90
      %s92 = sphi 0, %s90
      %s93 = sphi 0, %s92
      %s107 = sphi 0, %s93
      %s111 = sphi 0, %s111
      %s113 = sphi 0, %s111
      %s114 = sphi 0, %s113
      %s128 = sphi 0, %s114
      %s134 = sphi 0, %s136
      %s137 = sphi 0, %s134
      %s138 = sphi 0, %s137
      %s154 = sphi 0, %s138
    $region4: #{tpu_custom_call.1} parent=1 // loop_header_branch
      %17 = sbr.rel (%p15) target = $region8
    $region5: #{tpu_custom_call.1} parent=1 // loop_body
      %s19 = ssub.s32 %s14, 1
      %s20 = ssub.s32 %s14, 2
      %s21 = sadd.s32 %s14, 1
      %s22 = ssub.s32 %s14, %s21
      %p23 = scmp.eq.s32.totalorder %s22, 0
      %s25 = sadd.s32 %s24, 1
      %s26 = scalar_select %p23, %s24, %s25
      %p29 = pneg %p23
      %p30 = scmp.eq.s32.totalorder %s14, 1
      %p31 = por %p29, %p30
      %p32 = scmp.ne.s32.totalorder %s24, %s27
      %p33 = scmp.eq.s32.totalorder %s14, 0
      %p34 = por %p32, %p33
      %p35 = scmp.ne.s32.totalorder %s24, %s27
      %p36 = scmp.eq.s32.totalorder %s19, 1
      %p37 = por %p35, %p36
      %p38 = scmp.ne.s32.totalorder %s27, %s28
      %p39 = scmp.eq.s32.totalorder %s19, 0
      %p40 = por %p38, %p39
      %p41 = scmp.ne.s32.totalorder %s27, %s28
      %p42 = scmp.eq.s32.totalorder %s20, 1
      %p43 = por %p41, %p42
      %p45 = scmp.ne.s32.totalorder %s28, %s44
      %p46 = scmp.eq.s32.totalorder %s20, 0
      %p47 = por %p45, %p46
      %s49 = sadd.s32 %s48, 1
      %p52 = scmp.eq.s32.totalorder %s14, 1
      %p53 = scmp.ne.s32.totalorder %s48, %s50
      %p54 = scmp.eq.s32.totalorder %s14, 0
      %p55 = por %p53, %p54
      %p56 = scmp.ne.s32.totalorder %s48, %s50
      %p57 = scmp.eq.s32.totalorder %s19, 1
      %p58 = por %p56, %p57
      %p59 = scmp.ne.s32.totalorder %s50, %s51
      %p60 = scmp.eq.s32.totalorder %s19, 0
      %p61 = por %p59, %p60
      %p62 = scmp.ne.s32.totalorder %s50, %s51
      %p63 = scmp.eq.s32.totalorder %s20, 1
      %p64 = por %p62, %p63
      %p66 = scmp.ne.s32.totalorder %s51, %s65
      %p67 = scmp.eq.s32.totalorder %s20, 0
      %p68 = por %p66, %p67
      %s70 = sadd.s32 %s69, 1
      %p73 = scmp.eq.s32.totalorder %s14, 1
      %p74 = scmp.ne.s32.totalorder %s69, %s71
      %p75 = scmp.eq.s32.totalorder %s14, 0
      %p76 = por %p74, %p75
      %p77 = scmp.ne.s32.totalorder %s69, %s71
      %p78 = scmp.eq.s32.totalorder %s19, 1
      %p79 = por %p77, %p78
      %p80 = scmp.ne.s32.totalorder %s71, %s72
      %p81 = scmp.eq.s32.totalorder %s19, 0
      %p82 = por %p80, %p81
      %p83 = scmp.ne.s32.totalorder %s71, %s72
      %p84 = scmp.eq.s32.totalorder %s20, 1
      %p85 = por %p83, %p84
      %p87 = scmp.ne.s32.totalorder %s72, %s86
      %p88 = scmp.eq.s32.totalorder %s20, 0
      %p89 = por %p87, %p88
      %s91 = sadd.s32 %s90, 1
      %p94 = scmp.eq.s32.totalorder %s14, 1
      %p95 = scmp.ne.s32.totalorder %s90, %s92
      %p96 = scmp.eq.s32.totalorder %s14, 0
      %p97 = por %p95, %p96
      %p98 = scmp.ne.s32.totalorder %s90, %s92
      %p99 = scmp.eq.s32.totalorder %s19, 1
      %p100 = por %p98, %p99
      %p101 = scmp.ne.s32.totalorder %s92, %s93
      %p102 = scmp.eq.s32.totalorder %s19, 0
      %p103 = por %p101, %p102
      %p104 = scmp.ne.s32.totalorder %s92, %s93
      %p105 = scmp.eq.s32.totalorder %s20, 1
      %p106 = por %p104, %p105
      %p108 = scmp.ne.s32.totalorder %s93, %s107
      %p109 = scmp.eq.s32.totalorder %s20, 0
      %p110 = por %p108, %p109
      %s112 = sadd.s32 %s111, 1
      %p115 = scmp.eq.s32.totalorder %s14, 1
      %p116 = scmp.ne.s32.totalorder %s111, %s113
      %p117 = scmp.eq.s32.totalorder %s14, 0
      %p118 = por %p116, %p117
      %p119 = scmp.ne.s32.totalorder %s111, %s113
      %p120 = scmp.eq.s32.totalorder %s19, 1
      %p121 = por %p119, %p120
      %p122 = scmp.ne.s32.totalorder %s113, %s114
      %p123 = scmp.eq.s32.totalorder %s19, 0
      %p124 = por %p122, %p123
      %p125 = scmp.ne.s32.totalorder %s113, %s114
      %p126 = scmp.eq.s32.totalorder %s20, 1
      %p127 = por %p125, %p126
      %p129 = scmp.ne.s32.totalorder %s114, %s128
      %p130 = scmp.eq.s32.totalorder %s20, 0
      %p131 = por %p129, %p130
      %s132 = ssub.s32 %s14, %s21
      %p133 = scmp.eq.s32.totalorder %s132, 0
      %s135 = sadd.s32 %s134, 1
      %s136 = scalar_select %p133, %s134, %s135
      %p139 = pneg %p133
      %p140 = scmp.eq.s32.totalorder %s14, 1
      %p141 = por %p139, %p140
      %p142 = scmp.ne.s32.totalorder %s134, %s137
      %p143 = scmp.eq.s32.totalorder %s14, 0
      %p144 = por %p142, %p143
      %p145 = scmp.ne.s32.totalorder %s134, %s137
      %p146 = scmp.eq.s32.totalorder %s19, 1
      %p147 = por %p145, %p146
      %p148 = scmp.ne.s32.totalorder %s137, %s138
      %p149 = scmp.eq.s32.totalorder %s19, 0
      %p150 = por %p148, %p149
      %p151 = scmp.ne.s32.totalorder %s137, %s138
      %p152 = scmp.eq.s32.totalorder %s20, 1
      %p153 = por %p151, %p152
      %p155 = scmp.ne.s32.totalorder %s138, %s154
      %p156 = scmp.eq.s32.totalorder %s20, 0
      %p157 = por %p155, %p156
      %p158 = scmp.le.s32.totalorder 1, %s14
      %p159 = scmp.lt.s32.totalorder %s14, 3
      %p160 = pnand %p158, %p159
      %p161 = pneg %p160
      // Predicated region
      $region9: #{tpu_custom_call.1} parent=5 // pred_check
        _
      $region10: #{tpu_custom_call.1} parent=5 // pred_check_branch
        %163 = sbr.rel (%p160) target = $region12
      $region11: #{tpu_custom_call.1} parent=5 // pred_region
        %s164 = ssub.s32 %s14, 1
        // Predicated region
        $region13: #{tpu_custom_call.1} parent=11 // pred_check
          %p165 = pneg %p61
        $region14: #{tpu_custom_call.1} parent=11 // pred_check_branch
          %167 = sbr.rel (%p165) target = $region16
        $region15: #{tpu_custom_call.1} parent=11 // pred_region
          _
        $region16: #{tpu_custom_call.1} parent=11 // pred_fallthru
          _
        // Predicated region
        $region17: #{tpu_custom_call.1} parent=11 // pred_check
          %p168 = pneg %p82
        $region18: #{tpu_custom_call.1} parent=11 // pred_check_branch
          %170 = sbr.rel (%p168) target = $region20
        $region19: #{tpu_custom_call.1} parent=11 // pred_region
          _
        $region20: #{tpu_custom_call.1} parent=11 // pred_fallthru
          _
        // Predicated region
        $region21: #{tpu_custom_call.1} parent=11 // pred_check
          %p171 = pneg %p103
        $region22: #{tpu_custom_call.1} parent=11 // pred_check_branch
          %173 = sbr.rel (%p171) target = $region24
        $region23: #{tpu_custom_call.1} parent=11 // pred_region
          _
        $region24: #{tpu_custom_call.1} parent=11 // pred_fallthru
          _
        // Predicated region
        $region25: #{tpu_custom_call.1} parent=11 // pred_check
          %p174 = pneg %p124
        $region26: #{tpu_custom_call.1} parent=11 // pred_check_branch
          %176 = sbr.rel (%p174) target = $region28
        $region27: #{tpu_custom_call.1} parent=11 // pred_region
          _
        $region28: #{tpu_custom_call.1} parent=11 // pred_fallthru
          _
      $region12: #{tpu_custom_call.1} parent=5 // pred_fallthru
        _
      %p177 = scmp.lt.s32.totalorder %s14, 2
      // Predicated region
      $region29: #{tpu_custom_call.1} parent=5 // pred_check
        %p178 = pneg %p177
      $region30: #{tpu_custom_call.1} parent=5 // pred_check_branch
        %180 = sbr.rel (%p178) target = $region32
      $region31: #{tpu_custom_call.1} parent=5 // pred_region
        // Predicated region
        $region33: #{tpu_custom_call.1} parent=31 // pred_check
          %p181 = pneg %p34
        $region34: #{tpu_custom_call.1} parent=31 // pred_check_branch
          %183 = sbr.rel (%p181) target = $region36
        $region35: #{tpu_custom_call.1} parent=31 // pred_region
          %p184 = scmp.lt.s32.totalorder %s14, 1
          %s185 = scalar_select %p184, %s14, 1
          %s186 = smul.addr %s185, 32
          %s187 = smul.addr %s186, 8
          %s188 = scalar_lea.vmem %s0, %s187
        $region36: #{tpu_custom_call.1} parent=31 // pred_fallthru
          _
      $region32: #{tpu_custom_call.1} parent=5 // pred_fallthru
        _
      %p189 = scmp.le.s32.totalorder 1, %s14
      %p190 = scmp.lt.s32.totalorder %s14, 3
      %p191 = pnand %p189, %p190
      %p192 = pneg %p191
      // Predicated region
      $region37: #{tpu_custom_call.1} parent=5 // pred_check
        _
      $region38: #{tpu_custom_call.1} parent=5 // pred_check_branch
        %194 = sbr.rel (%p191) target = $region40
      $region39: #{tpu_custom_call.1} parent=5 // pred_region
        %s195 = ssub.s32 %s14, 1
        %p196 = scmp.lt.s32.totalorder %s19, 1
        %s197 = scalar_select %p196, %s19, 1
        %s198 = smul.addr %s197, 32
        %s199 = smul.addr %s198, 8
        %s200 = scalar_lea.vmem %s0, %s199
        %p201 = pneg %p40
        %p202 = pneg %p37
        %p203 = pneg %p61
        %p204 = pneg %p58
        %p205 = pneg %p82
        %p206 = pneg %p79
        %p207 = pneg %p103
        %p208 = pneg %p100
        %p209 = pneg %p124
        %p210 = pneg %p121
        %p211 = pneg %p150
        %p212 = pneg %p147
        %s213 = sand.u32 %s137, 1
        %s214 = scalar_lea.sflag [#allocation3], %s213
        %s215 = sand.u32 %s137, 1
        %s216 = smul.addr %s215, 64
        %s217 = scalar_lea.vmem [#allocation2], %s216
        %p218 = scmp.lt.s32.totalorder %s19, 1
        %s219 = scalar_select %p218, %s19, 1
        %s220 = smul.addr %s219, 32
        %s221 = smul.addr %s220, 8
        %s222 = scalar_lea.vmem %s0, %s221
        %v224 = vld [vmem:[%s222] sm:$0xff]
        %v225 = vld [vmem:[%s222 + $0x8] sm:$0xff]
        %v226 = vld [vmem:[%s222 + $0x10] sm:$0xff]
        %v227 = vld [vmem:[%s222 + $0x18] sm:$0xff]
        %v228 = vld [vmem:[%s222 + $0x20] sm:$0xff]
        %v229 = vld [vmem:[%s222 + $0x28] sm:$0xff]
        %v230 = vld [vmem:[%s222 + $0x30] sm:$0xff]
        %v231 = vld [vmem:[%s222 + $0x38] sm:$0xff]
        %v232 = vld [vmem:[%s222 + $0x40] sm:$0xff]
        %v233 = vld [vmem:[%s222 + $0x48] sm:$0xff]
        %v234 = vld [vmem:[%s222 + $0x50] sm:$0xff]
        %v235 = vld [vmem:[%s222 + $0x58] sm:$0xff]
        %v236 = vld [vmem:[%s222 + $0x60] sm:$0xff]
        %v237 = vld [vmem:[%s222 + $0x68] sm:$0xff]
        %v238 = vld [vmem:[%s222 + $0x70] sm:$0xff]
        %v239 = vld [vmem:[%s222 + $0x78] sm:$0xff]
        %v240 = vld [vmem:[%s222 + $0x80] sm:$0xff]
        %v241 = vld [vmem:[%s222 + $0x88] sm:$0xff]
        %v242 = vld [vmem:[%s222 + $0x90] sm:$0xff]
        %v243 = vld [vmem:[%s222 + $0x98] sm:$0xff]
        %v244 = vld [vmem:[%s222 + $0xa0] sm:$0xff]
        %v245 = vld [vmem:[%s222 + $0xa8] sm:$0xff]
        %v246 = vld [vmem:[%s222 + $0xb0] sm:$0xff]
        %v247 = vld [vmem:[%s222 + $0xb8] sm:$0xff]
        %v248 = vld [vmem:[%s222 + $0xc0] sm:$0xff]
        %v249 = vld [vmem:[%s222 + $0xc8] sm:$0xff]
        %v250 = vld [vmem:[%s222 + $0xd0] sm:$0xff]
        %v251 = vld [vmem:[%s222 + $0xd8] sm:$0xff]
        %v252 = vld [vmem:[%s222 + $0xe0] sm:$0xff]
        %v253 = vld [vmem:[%s222 + $0xe8] sm:$0xff]
        %v254 = vld [vmem:[%s222 + $0xf0] sm:$0xff]
        %v255 = vld [vmem:[%s222 + $0xf8] sm:$0xff]
        %vm256 = vcmask 523264
        %v257 = vsel %vm256, %v224, 0.0
        %258 = vadd.xlane.f32.xlu0 %v257
        %v259 = vpop.xlane.xlu0 %258
        %v260 = vsel %vm256, %v225, 0.0
        %261 = vadd.xlane.f32.xlu0 %v260
        %v262 = vpop.xlane.xlu0 %261
        %v263 = vsel %vm256, %v226, 0.0
        %264 = vadd.xlane.f32.xlu0 %v263
        %v265 = vpop.xlane.xlu0 %264
        %v266 = vsel %vm256, %v227, 0.0
        %267 = vadd.xlane.f32.xlu0 %v266
        %v268 = vpop.xlane.xlu0 %267
        %v269 = vsel %vm256, %v228, 0.0
        %270 = vadd.xlane.f32.xlu0 %v269
        %v271 = vpop.xlane.xlu0 %270
        %v272 = vsel %vm256, %v229, 0.0
        %273 = vadd.xlane.f32.xlu0 %v272
        %v274 = vpop.xlane.xlu0 %273
        %v275 = vsel %vm256, %v230, 0.0
        %276 = vadd.xlane.f32.xlu0 %v275
        %v277 = vpop.xlane.xlu0 %276
        %v278 = vsel %vm256, %v231, 0.0
        %279 = vadd.xlane.f32.xlu0 %v278
        %v280 = vpop.xlane.xlu0 %279
        %v281 = vsel %vm256, %v232, 0.0
        %282 = vadd.xlane.f32.xlu0 %v281
        %v283 = vpop.xlane.xlu0 %282
        %v284 = vsel %vm256, %v233, 0.0
        %285 = vadd.xlane.f32.xlu0 %v284
        %v286 = vpop.xlane.xlu0 %285
        %v287 = vsel %vm256, %v234, 0.0
        %288 = vadd.xlane.f32.xlu0 %v287
        %v289 = vpop.xlane.xlu0 %288
        %v290 = vsel %vm256, %v235, 0.0
        %291 = vadd.xlane.f32.xlu0 %v290
        %v292 = vpop.xlane.xlu0 %291
        %v293 = vsel %vm256, %v236, 0.0
        %294 = vadd.xlane.f32.xlu0 %v293
        %v295 = vpop.xlane.xlu0 %294
        %v296 = vsel %vm256, %v237, 0.0
        %297 = vadd.xlane.f32.xlu0 %v296
        %v298 = vpop.xlane.xlu0 %297
        %v299 = vsel %vm256, %v238, 0.0
        %300 = vadd.xlane.f32.xlu0 %v299
        %v301 = vpop.xlane.xlu0 %300
        %v302 = vsel %vm256, %v239, 0.0
        %303 = vadd.xlane.f32.xlu0 %v302
        %v304 = vpop.xlane.xlu0 %303
        %v305 = vsel %vm256, %v240, 0.0
        %306 = vadd.xlane.f32.xlu0 %v305
        %v307 = vpop.xlane.xlu0 %306
        %v308 = vsel %vm256, %v241, 0.0
        %309 = vadd.xlane.f32.xlu0 %v308
        %v310 = vpop.xlane.xlu0 %309
        %v311 = vsel %vm256, %v242, 0.0
        %312 = vadd.xlane.f32.xlu0 %v311
        %v313 = vpop.xlane.xlu0 %312
        %v314 = vsel %vm256, %v243, 0.0
        %315 = vadd.xlane.f32.xlu0 %v314
        %v316 = vpop.xlane.xlu0 %315
        %v317 = vsel %vm256, %v244, 0.0
        %318 = vadd.xlane.f32.xlu0 %v317
        %v319 = vpop.xlane.xlu0 %318
        %v320 = vsel %vm256, %v245, 0.0
        %321 = vadd.xlane.f32.xlu0 %v320
        %v322 = vpop.xlane.xlu0 %321
        %v323 = vsel %vm256, %v246, 0.0
        %324 = vadd.xlane.f32.xlu0 %v323
        %v325 = vpop.xlane.xlu0 %324
        %v326 = vsel %vm256, %v247, 0.0
        %327 = vadd.xlane.f32.xlu0 %v326
        %v328 = vpop.xlane.xlu0 %327
        %v329 = vsel %vm256, %v248, 0.0
        %330 = vadd.xlane.f32.xlu0 %v329
        %v331 = vpop.xlane.xlu0 %330
        %v332 = vsel %vm256, %v249, 0.0
        %333 = vadd.xlane.f32.xlu0 %v332
        %v334 = vpop.xlane.xlu0 %333
        %v335 = vsel %vm256, %v250, 0.0
        %336 = vadd.xlane.f32.xlu0 %v335
        %v337 = vpop.xlane.xlu0 %336
        %v338 = vsel %vm256, %v251, 0.0
        %339 = vadd.xlane.f32.xlu0 %v338
        %v340 = vpop.xlane.xlu0 %339
        %v341 = vsel %vm256, %v252, 0.0
        %342 = vadd.xlane.f32.xlu0 %v341
        %v343 = vpop.xlane.xlu0 %342
        %v344 = vsel %vm256, %v253, 0.0
        %345 = vadd.xlane.f32.xlu0 %v344
        %v346 = vpop.xlane.xlu0 %345
        %v347 = vsel %vm256, %v254, 0.0
        %348 = vadd.xlane.f32.xlu0 %v347
        %v349 = vpop.xlane.xlu0 %348
        %v350 = vsel %vm256, %v255, 0.0
        %351 = vadd.xlane.f32.xlu0 %v350
        %v352 = vpop.xlane.xlu0 %351
        %v353 = vrcp.pop 64.0
        %v354 = vmul.f32 %v259, %v353
        %v355 = vmul.f32 %v262, %v353
        %v356 = vmul.f32 %v265, %v353
        %v357 = vmul.f32 %v268, %v353
        %v358 = vmul.f32 %v271, %v353
        %v359 = vmul.f32 %v274, %v353
        %v360 = vmul.f32 %v277, %v353
        %v361 = vmul.f32 %v280, %v353
        %v362 = vmul.f32 %v283, %v353
        %v363 = vmul.f32 %v286, %v353
        %v364 = vmul.f32 %v289, %v353
        %v365 = vmul.f32 %v292, %v353
        %v366 = vmul.f32 %v295, %v353
        %v367 = vmul.f32 %v298, %v353
        %v368 = vmul.f32 %v301, %v353
        %v369 = vmul.f32 %v304, %v353
        %v370 = vmul.f32 %v307, %v353
        %v371 = vmul.f32 %v310, %v353
        %v372 = vmul.f32 %v313, %v353
        %v373 = vmul.f32 %v316, %v353
        %v374 = vmul.f32 %v319, %v353
        %v375 = vmul.f32 %v322, %v353
        %v376 = vmul.f32 %v325, %v353
        %v377 = vmul.f32 %v328, %v353
        %v378 = vmul.f32 %v331, %v353
        %v379 = vmul.f32 %v334, %v353
        %v380 = vmul.f32 %v337, %v353
        %v381 = vmul.f32 %v340, %v353
        %v382 = vmul.f32 %v343, %v353
        %v383 = vmul.f32 %v346, %v353
        %v384 = vmul.f32 %v349, %v353
        %v385 = vmul.f32 %v352, %v353
        %v386 = vsub.f32 %v224, %v354
        %v387 = vsub.f32 %v225, %v355
        %v388 = vsub.f32 %v226, %v356
        %v389 = vsub.f32 %v227, %v357
        %v390 = vsub.f32 %v228, %v358
        %v391 = vsub.f32 %v229, %v359
        %v392 = vsub.f32 %v230, %v360
        %v393 = vsub.f32 %v231, %v361
        %v394 = vsub.f32 %v232, %v362
        %v395 = vsub.f32 %v233, %v363
        %v396 = vsub.f32 %v234, %v364
        %v397 = vsub.f32 %v235, %v365
        %v398 = vsub.f32 %v236, %v366
        %v399 = vsub.f32 %v237, %v367
        %v400 = vsub.f32 %v238, %v368
        %v401 = vsub.f32 %v239, %v369
        %v402 = vsub.f32 %v240, %v370
        %v403 = vsub.f32 %v241, %v371
        %v404 = vsub.f32 %v242, %v372
        %v405 = vsub.f32 %v243, %v373
        %v406 = vsub.f32 %v244, %v374
        %v407 = vsub.f32 %v245, %v375
        %v408 = vsub.f32 %v246, %v376
        %v409 = vsub.f32 %v247, %v377
        %v410 = vsub.f32 %v248, %v378
        %v411 = vsub.f32 %v249, %v379
        %v412 = vsub.f32 %v250, %v380
        %v413 = vsub.f32 %v251, %v381
        %v414 = vsub.f32 %v252, %v382
        %v415 = vsub.f32 %v253, %v383
        %v416 = vsub.f32 %v254, %v384
        %v417 = vsub.f32 %v255, %v385
        %v418 = vmul.f32 %v386, %v386
        %v419 = vmul.f32 %v387, %v387
        %v420 = vmul.f32 %v388, %v388
        %v421 = vmul.f32 %v389, %v389
        %v422 = vmul.f32 %v390, %v390
        %v423 = vmul.f32 %v391, %v391
        %v424 = vmul.f32 %v392, %v392
        %v425 = vmul.f32 %v393, %v393
        %v426 = vmul.f32 %v394, %v394
        %v427 = vmul.f32 %v395, %v395
        %v428 = vmul.f32 %v396, %v396
        %v429 = vmul.f32 %v397, %v397
        %v430 = vmul.f32 %v398, %v398
        %v431 = vmul.f32 %v399, %v399
        %v432 = vmul.f32 %v400, %v400
        %v433 = vmul.f32 %v401, %v401
        %v434 = vmul.f32 %v402, %v402
        %v435 = vmul.f32 %v403, %v403
        %v436 = vmul.f32 %v404, %v404
        %v437 = vmul.f32 %v405, %v405
        %v438 = vmul.f32 %v406, %v406
        %v439 = vmul.f32 %v407, %v407
        %v440 = vmul.f32 %v408, %v408
        %v441 = vmul.f32 %v409, %v409
        %v442 = vmul.f32 %v410, %v410
        %v443 = vmul.f32 %v411, %v411
        %v444 = vmul.f32 %v412, %v412
        %v445 = vmul.f32 %v413, %v413
        %v446 = vmul.f32 %v414, %v414
        %v447 = vmul.f32 %v415, %v415
        %v448 = vmul.f32 %v416, %v416
        %v449 = vmul.f32 %v417, %v417
        %v450 = vsel %vm256, %v418, 0.0
        %451 = vadd.xlane.f32.xlu0 %v450
        %v452 = vpop.xlane.xlu0 %451
        %v453 = vsel %vm256, %v419, 0.0
        %454 = vadd.xlane.f32.xlu0 %v453
        %v455 = vpop.xlane.xlu0 %454
        %v456 = vsel %vm256, %v420, 0.0
        %457 = vadd.xlane.f32.xlu0 %v456
        %v458 = vpop.xlane.xlu0 %457
        %v459 = vsel %vm256, %v421, 0.0
        %460 = vadd.xlane.f32.xlu0 %v459
        %v461 = vpop.xlane.xlu0 %460
        %v462 = vsel %vm256, %v422, 0.0
        %463 = vadd.xlane.f32.xlu0 %v462
        %v464 = vpop.xlane.xlu0 %463
        %v465 = vsel %vm256, %v423, 0.0
        %466 = vadd.xlane.f32.xlu0 %v465
        %v467 = vpop.xlane.xlu0 %466
        %v468 = vsel %vm256, %v424, 0.0
        %469 = vadd.xlane.f32.xlu0 %v468
        %v470 = vpop.xlane.xlu0 %469
        %v471 = vsel %vm256, %v425, 0.0
        %472 = vadd.xlane.f32.xlu0 %v471
        %v473 = vpop.xlane.xlu0 %472
        %v474 = vsel %vm256, %v426, 0.0
        %475 = vadd.xlane.f32.xlu0 %v474
        %v476 = vpop.xlane.xlu0 %475
        %v477 = vsel %vm256, %v427, 0.0
        %478 = vadd.xlane.f32.xlu0 %v477
        %v479 = vpop.xlane.xlu0 %478
        %v480 = vsel %vm256, %v428, 0.0
        %481 = vadd.xlane.f32.xlu0 %v480
        %v482 = vpop.xlane.xlu0 %481
        %v483 = vsel %vm256, %v429, 0.0
        %484 = vadd.xlane.f32.xlu0 %v483
        %v485 = vpop.xlane.xlu0 %484
        %v486 = vsel %vm256, %v430, 0.0
        %487 = vadd.xlane.f32.xlu0 %v486
        %v488 = vpop.xlane.xlu0 %487
        %v489 = vsel %vm256, %v431, 0.0
        %490 = vadd.xlane.f32.xlu0 %v489
        %v491 = vpop.xlane.xlu0 %490
        %v492 = vsel %vm256, %v432, 0.0
        %493 = vadd.xlane.f32.xlu0 %v492
        %v494 = vpop.xlane.xlu0 %493
        %v495 = vsel %vm256, %v433, 0.0
        %496 = vadd.xlane.f32.xlu0 %v495
        %v497 = vpop.xlane.xlu0 %496
        %v498 = vsel %vm256, %v434, 0.0
        %499 = vadd.xlane.f32.xlu0 %v498
        %v500 = vpop.xlane.xlu0 %499
        %v501 = vsel %vm256, %v435, 0.0
        %502 = vadd.xlane.f32.xlu0 %v501
        %v503 = vpop.xlane.xlu0 %502
        %v504 = vsel %vm256, %v436, 0.0
        %505 = vadd.xlane.f32.xlu0 %v504
        %v506 = vpop.xlane.xlu0 %505
        %v507 = vsel %vm256, %v437, 0.0
        %508 = vadd.xlane.f32.xlu0 %v507
        %v509 = vpop.xlane.xlu0 %508
        %v510 = vsel %vm256, %v438, 0.0
        %511 = vadd.xlane.f32.xlu0 %v510
        %v512 = vpop.xlane.xlu0 %511
        %v513 = vsel %vm256, %v439, 0.0
        %514 = vadd.xlane.f32.xlu0 %v513
        %v515 = vpop.xlane.xlu0 %514
        %v516 = vsel %vm256, %v440, 0.0
        %517 = vadd.xlane.f32.xlu0 %v516
        %v518 = vpop.xlane.xlu0 %517
        %v519 = vsel %vm256, %v441, 0.0
        %520 = vadd.xlane.f32.xlu0 %v519
        %v521 = vpop.xlane.xlu0 %520
        %v522 = vsel %vm256, %v442, 0.0
        %523 = vadd.xlane.f32.xlu0 %v522
        %v524 = vpop.xlane.xlu0 %523
        %v525 = vsel %vm256, %v443, 0.0
        %526 = vadd.xlane.f32.xlu0 %v525
        %v527 = vpop.xlane.xlu0 %526
        %v528 = vsel %vm256, %v444, 0.0
        %529 = vadd.xlane.f32.xlu0 %v528
        %v530 = vpop.xlane.xlu0 %529
        %v531 = vsel %vm256, %v445, 0.0
        %532 = vadd.xlane.f32.xlu0 %v531
        %v533 = vpop.xlane.xlu0 %532
        %v534 = vsel %vm256, %v446, 0.0
        %535 = vadd.xlane.f32.xlu0 %v534
        %v536 = vpop.xlane.xlu0 %535
        %v537 = vsel %vm256, %v447, 0.0
        %538 = vadd.xlane.f32.xlu0 %v537
        %v539 = vpop.xlane.xlu0 %538
        %v540 = vsel %vm256, %v448, 0.0
        %541 = vadd.xlane.f32.xlu0 %v540
        %v542 = vpop.xlane.xlu0 %541
        %v543 = vsel %vm256, %v449, 0.0
        %544 = vadd.xlane.f32.xlu0 %v543
        %v545 = vpop.xlane.xlu0 %544
        %v546 = vmul.f32 %v452, %v353
        %v547 = vmul.f32 %v455, %v353
        %v548 = vmul.f32 %v458, %v353
        %v549 = vmul.f32 %v461, %v353
        %v550 = vmul.f32 %v464, %v353
        %v551 = vmul.f32 %v467, %v353
        %v552 = vmul.f32 %v470, %v353
        %v553 = vmul.f32 %v473, %v353
        %v554 = vmul.f32 %v476, %v353
        %v555 = vmul.f32 %v479, %v353
        %v556 = vmul.f32 %v482, %v353
        %v557 = vmul.f32 %v485, %v353
        %v558 = vmul.f32 %v488, %v353
        %v559 = vmul.f32 %v491, %v353
        %v560 = vmul.f32 %v494, %v353
        %v561 = vmul.f32 %v497, %v353
        %v562 = vmul.f32 %v500, %v353
        %v563 = vmul.f32 %v503, %v353
        %v564 = vmul.f32 %v506, %v353
        %v565 = vmul.f32 %v509, %v353
        %v566 = vmul.f32 %v512, %v353
        %v567 = vmul.f32 %v515, %v353
        %v568 = vmul.f32 %v518, %v353
        %v569 = vmul.f32 %v521, %v353
        %v570 = vmul.f32 %v524, %v353
        %v571 = vmul.f32 %v527, %v353
        %v572 = vmul.f32 %v530, %v353
        %v573 = vmul.f32 %v533, %v353
        %v574 = vmul.f32 %v536, %v353
        %v575 = vmul.f32 %v539, %v353
        %v576 = vmul.f32 %v542, %v353
        %v577 = vmul.f32 %v545, %v353
        %v578 = vadd.f32 %v546, 1e-05
        %v579 = vadd.f32 %v547, 1e-05
        %v580 = vadd.f32 %v548, 1e-05
        %v581 = vadd.f32 %v549, 1e-05
        %v582 = vadd.f32 %v550, 1e-05
        %v583 = vadd.f32 %v551, 1e-05
        %v584 = vadd.f32 %v552, 1e-05
        %v585 = vadd.f32 %v553, 1e-05
        %v586 = vadd.f32 %v554, 1e-05
        %v587 = vadd.f32 %v555, 1e-05
        %v588 = vadd.f32 %v556, 1e-05
        %v589 = vadd.f32 %v557, 1e-05
        %v590 = vadd.f32 %v558, 1e-05
        %v591 = vadd.f32 %v559, 1e-05
        %v592 = vadd.f32 %v560, 1e-05
        %v593 = vadd.f32 %v561, 1e-05
        %v594 = vadd.f32 %v562, 1e-05
        %v595 = vadd.f32 %v563, 1e-05
        %v596 = vadd.f32 %v564, 1e-05
        %v597 = vadd.f32 %v565, 1e-05
        %v598 = vadd.f32 %v566, 1e-05
        %v599 = vadd.f32 %v567, 1e-05
        %v600 = vadd.f32 %v568, 1e-05
        %v601 = vadd.f32 %v569, 1e-05
        %v602 = vadd.f32 %v570, 1e-05
        %v603 = vadd.f32 %v571, 1e-05
        %v604 = vadd.f32 %v572, 1e-05
        %v605 = vadd.f32 %v573, 1e-05
        %v606 = vadd.f32 %v574, 1e-05
        %v607 = vadd.f32 %v575, 1e-05
        %v608 = vadd.f32 %v576, 1e-05
        %v609 = vadd.f32 %v577, 1e-05
        %v610 = vrsqrt.pop %v578
        %v611 = vrsqrt.pop %v579
        %v612 = vrsqrt.pop %v580
        %v613 = vrsqrt.pop %v581
        %v614 = vrsqrt.pop %v582
        %v615 = vrsqrt.pop %v583
        %v616 = vrsqrt.pop %v584
        %v617 = vrsqrt.pop %v585
        %v618 = vrsqrt.pop %v586
        %v619 = vrsqrt.pop %v587
        %v620 = vrsqrt.pop %v588
        %v621 = vrsqrt.pop %v589
        %v622 = vrsqrt.pop %v590
        %v623 = vrsqrt.pop %v591
        %v624 = vrsqrt.pop %v592
        %v625 = vrsqrt.pop %v593
        %v626 = vrsqrt.pop %v594
        %v627 = vrsqrt.pop %v595
        %v628 = vrsqrt.pop %v596
        %v629 = vrsqrt.pop %v597
        %v630 = vrsqrt.pop %v598
        %v631 = vrsqrt.pop %v599
        %v632 = vrsqrt.pop %v600
        %v633 = vrsqrt.pop %v601
        %v634 = vrsqrt.pop %v602
        %v635 = vrsqrt.pop %v603
        %v636 = vrsqrt.pop %v604
        %v637 = vrsqrt.pop %v605
        %v638 = vrsqrt.pop %v606
        %v639 = vrsqrt.pop %v607
        %v640 = vrsqrt.pop %v608
        %v641 = vrsqrt.pop %v609
        %v642 = vmul.f32 %v386, %v610
        %v643 = vmul.f32 %v387, %v611
        %v644 = vmul.f32 %v388, %v612
        %v645 = vmul.f32 %v389, %v613
        %v646 = vmul.f32 %v390, %v614
        %v647 = vmul.f32 %v391, %v615
        %v648 = vmul.f32 %v392, %v616
        %v649 = vmul.f32 %v393, %v617
        %v650 = vmul.f32 %v394, %v618
        %v651 = vmul.f32 %v395, %v619
        %v652 = vmul.f32 %v396, %v620
        %v653 = vmul.f32 %v397, %v621
        %v654 = vmul.f32 %v398, %v622
        %v655 = vmul.f32 %v399, %v623
        %v656 = vmul.f32 %v400, %v624
        %v657 = vmul.f32 %v401, %v625
        %v658 = vmul.f32 %v402, %v626
        %v659 = vmul.f32 %v403, %v627
        %v660 = vmul.f32 %v404, %v628
        %v661 = vmul.f32 %v405, %v629
        %v662 = vmul.f32 %v406, %v630
        %v663 = vmul.f32 %v407, %v631
        %v664 = vmul.f32 %v408, %v632
        %v665 = vmul.f32 %v409, %v633
        %v666 = vmul.f32 %v410, %v634
        %v667 = vmul.f32 %v411, %v635
        %v668 = vmul.f32 %v412, %v636
        %v669 = vmul.f32 %v413, %v637
        %v670 = vmul.f32 %v414, %v638
        %v671 = vmul.f32 %v415, %v639
        %v672 = vmul.f32 %v416, %v640
        %v673 = vmul.f32 %v417, %v641
        %v674 = vld [vmem:[%s2] sm:$0x1]
        %v676 = vlaneseq
        %v677 = vshrl.u32 %v676, 7
        %v678 = vsub.s32 0, %v677
        %v679 = vrot.slane %v674, %v678
        %v681 = vmul.f32 %v642, %v679
        %v682 = vmul.f32 %v643, %v679
        %v683 = vmul.f32 %v644, %v679
        %v684 = vmul.f32 %v645, %v679
        %v685 = vmul.f32 %v646, %v679
        %v686 = vmul.f32 %v647, %v679
        %v687 = vmul.f32 %v648, %v679
        %v688 = vmul.f32 %v649, %v679
        %v689 = vmul.f32 %v650, %v679
        %v690 = vmul.f32 %v651, %v679
        %v691 = vmul.f32 %v652, %v679
        %v692 = vmul.f32 %v653, %v679
        %v693 = vmul.f32 %v654, %v679
        %v694 = vmul.f32 %v655, %v679
        %v695 = vmul.f32 %v656, %v679
        %v696 = vmul.f32 %v657, %v679
        %v697 = vmul.f32 %v658, %v679
        %v698 = vmul.f32 %v659, %v679
        %v699 = vmul.f32 %v660, %v679
        %v700 = vmul.f32 %v661, %v679
        %v701 = vmul.f32 %v662, %v679
        %v702 = vmul.f32 %v663, %v679
        %v703 = vmul.f32 %v664, %v679
        %v704 = vmul.f32 %v665, %v679
        %v705 = vmul.f32 %v666, %v679
        %v706 = vmul.f32 %v667, %v679
        %v707 = vmul.f32 %v668, %v679
        %v708 = vmul.f32 %v669, %v679
        %v709 = vmul.f32 %v670, %v679
        %v710 = vmul.f32 %v671, %v679
        %v711 = vmul.f32 %v672, %v679
        %v712 = vmul.f32 %v673, %v679
        %v713 = vld [vmem:[%s3] sm:$0x1]
        %v715 = vlaneseq
        %v716 = vshrl.u32 %v715, 7
        %v717 = vsub.s32 0, %v716
        %v718 = vrot.slane %v713, %v717
        %v720 = vadd.f32 %v681, %v718
        %v721 = vadd.f32 %v682, %v718
        %v722 = vadd.f32 %v683, %v718
        %v723 = vadd.f32 %v684, %v718
        %v724 = vadd.f32 %v685, %v718
        %v725 = vadd.f32 %v686, %v718
        %v726 = vadd.f32 %v687, %v718
        %v727 = vadd.f32 %v688, %v718
        %v728 = vadd.f32 %v689, %v718
        %v729 = vadd.f32 %v690, %v718
        %v730 = vadd.f32 %v691, %v718
        %v731 = vadd.f32 %v692, %v718
        %v732 = vadd.f32 %v693, %v718
        %v733 = vadd.f32 %v694, %v718
        %v734 = vadd.f32 %v695, %v718
        %v735 = vadd.f32 %v696, %v718
        %v736 = vadd.f32 %v697, %v718
        %v737 = vadd.f32 %v698, %v718
        %v738 = vadd.f32 %v699, %v718
        %v739 = vadd.f32 %v700, %v718
        %v740 = vadd.f32 %v701, %v718
        %v741 = vadd.f32 %v702, %v718
        %v742 = vadd.f32 %v703, %v718
        %v743 = vadd.f32 %v704, %v718
        %v744 = vadd.f32 %v705, %v718
        %v745 = vadd.f32 %v706, %v718
        %v746 = vadd.f32 %v707, %v718
        %v747 = vadd.f32 %v708, %v718
        %v748 = vadd.f32 %v709, %v718
        %v749 = vadd.f32 %v710, %v718
        %v750 = vadd.f32 %v711, %v718
        %v751 = vadd.f32 %v712, %v718
        %v752 = vld [vmem:[%s1] sm:$0xff]
        %v753 = vld [vmem:[%s1 + $0x8] sm:$0xff]
        %v754 = vmul.f32 %v752, 0.125
        %v755 = vmul.f32 %v753, 0.125
        %v756 = vpack.c.bf16 %v755, %v754
        %v757 = vpack.c.bf16 %v721, %v720
        %v758 = vpack.c.bf16 %v723, %v722
        %v759 = vpack.c.bf16 %v725, %v724
        %v760 = vpack.c.bf16 %v727, %v726
        %v761 = vpack.c.bf16 %v729, %v728
        %v762 = vpack.c.bf16 %v731, %v730
        %v763 = vpack.c.bf16 %v733, %v732
        %v764 = vpack.c.bf16 %v735, %v734
        %v765 = vpack.c.bf16 %v737, %v736
        %v766 = vpack.c.bf16 %v739, %v738
        %v767 = vpack.c.bf16 %v741, %v740
        %v768 = vpack.c.bf16 %v743, %v742
        %v769 = vpack.c.bf16 %v745, %v744
        %v770 = vpack.c.bf16 %v747, %v746
        %v771 = vpack.c.bf16 %v749, %v748
        %v772 = vpack.c.bf16 %v751, %v750
        %v774 = vsel %vm256, %v756, 0
        %v777 = vsel %vm256, %v757, 0
        %v780 = vsel %vm256, %v758, 0
        %v783 = vsel %vm256, %v759, 0
        %v786 = vsel %vm256, %v760, 0
        %788 = vmatprep.subr.bf16.mxu0 0
        %789 = vmatpush1.bf16.xpose.msra.mxu0 %v777
        %790 = vmatprep.subr.bf16.mxu0 0
        %791 = vmatpush1.bf16.xpose.msra.mxu0 %v780
        %792 = vmatprep.subr.bf16.mxu0 0
        %793 = vmatpush1.bf16.xpose.msra.mxu0 %v783
        %794 = vmatprep.subr.bf16.mxu0 0
        %795 = vmatpush1.bf16.xpose.msra.mxu0 %v786
        %796 = vmatprep.subr.bf16.mxu0 0
        %797 = vmatpush1.bf16.xpose.msra.mxu0 0
        %798 = vmatprep.subr.bf16.mxu0 0
        %799 = vmatpush1.bf16.xpose.msra.mxu0 0
        %800 = vmatprep.subr.bf16.mxu0 0
        %801 = vmatpush1.bf16.xpose.msra.mxu0 0
        %802 = vmatprep.subr.bf16.mxu0 0
        %803 = vmatpush1.bf16.xpose.msra.mxu0 0
        %804 = vmatprep.subr.bf16.mxu0 0
        %805 = vmatpush1.bf16.xpose.msra.mxu0 0
        %806 = vmatprep.subr.bf16.mxu0 0
        %807 = vmatpush1.bf16.xpose.msra.mxu0 0
        %808 = vmatprep.subr.bf16.mxu0 0
        %809 = vmatpush1.bf16.xpose.msra.mxu0 0
        %810 = vmatprep.subr.bf16.mxu0 0
        %811 = vmatpush1.bf16.xpose.msra.mxu0 0
        %812 = vmatprep.subr.bf16.mxu0 0
        %813 = vmatpush1.bf16.xpose.msra.mxu0 0
        %814 = vmatprep.subr.bf16.mxu0 0
        %815 = vmatpush1.bf16.xpose.msra.mxu0 0
        %816 = vmatprep.subr.bf16.mxu0 0
        %817 = vmatpush1.bf16.xpose.msra.mxu0 0
        %818 = vmatprep.subr.bf16.mxu0 0
        %819 = vmatpush1.bf16.xpose.msra.mxu0 0
        %820 = vmatprep.mubr.bf16.mxu0 0
        %821 = vmatmul.mubr.bf16.gmra.mrb[0].mxu0 %v774
        %v822 = vpop.f32.mrb[0].mxu0
        %v823 = vadd.f32 0.0, %v822
        %v824 = vpop.f32.mrb[0].mxu0
        %v825 = vpop.f32.mrb[0].mxu0
        %v826 = vadd.f32 0.0, %v825
        %v827 = vpop.f32.mrb[0].mxu0
        %828 = vdwg.mxu0
        %v829 = vsel %vm256, %v823, -inf
        %830 = vmax.xlane.f32.xlu0 %v829
        %v831 = vpop.xlane.xlu0 %830
        %v832 = vsel %vm256, %v826, -inf
        %833 = vmax.xlane.f32.xlu0 %v832
        %v834 = vpop.xlane.xlu0 %833
        %v835 = vsub.f32 %v823, %v831
        %v836 = vsub.f32 %v826, %v834
        %v837 = vmul.f32 %v835, 1.442695
        %v838 = vpow.pop %v837
        %v839 = vmul.f32 %v836, 1.442695
        %v840 = vpow.pop %v839
        %v841 = vsel %vm256, %v838, 0.0
        %842 = vadd.xlane.f32.xlu0 %v841
        %v843 = vpop.xlane.xlu0 %842
        %v844 = vsel %vm256, %v840, 0.0
        %845 = vadd.xlane.f32.xlu0 %v844
        %v846 = vpop.xlane.xlu0 %845
        %v847 = vrcp.pop %v843
        %v848 = vrcp.pop %v846
        %v849 = vmul.f32 %v838, %v847
        %v850 = vmul.f32 %v840, %v848
        %v851 = vpack.c.bf16 %v850, %v849
        %v853 = vsel %vm256, %v851, 0
        %855 = vmatprep.subr.bf16.mxu0 0
        %856 = vmatpush1.bf16.msra.mxu0 %v757
        %857 = vmatprep.subr.bf16.mxu0 0
        %858 = vmatpush1.bf16.msra.mxu0 %v758
        %859 = vmatprep.subr.bf16.mxu0 0
        %860 = vmatpush1.bf16.msra.mxu0 %v759
        %861 = vmatprep.subr.bf16.mxu0 0
        %862 = vmatpush1.bf16.msra.mxu0 %v760
        %863 = vmatprep.subr.bf16.mxu0 0
        %864 = vmatpush1.bf16.msra.mxu0 0
        %865 = vmatprep.subr.bf16.mxu0 0
        %866 = vmatpush1.bf16.msra.mxu0 0
        %867 = vmatprep.subr.bf16.mxu0 0
        %868 = vmatpush1.bf16.msra.mxu0 0
        %869 = vmatprep.subr.bf16.mxu0 0
        %870 = vmatpush1.bf16.msra.mxu0 0
        %871 = vmatprep.subr.bf16.mxu0 0
        %872 = vmatpush1.bf16.msra.mxu0 0
        %873 = vmatprep.subr.bf16.mxu0 0
        %874 = vmatpush1.bf16.msra.mxu0 0
        %875 = vmatprep.subr.bf16.mxu0 0
        %876 = vmatpush1.bf16.msra.mxu0 0
        %877 = vmatprep.subr.bf16.mxu0 0
        %878 = vmatpush1.bf16.msra.mxu0 0
        %879 = vmatprep.subr.bf16.mxu0 0
        %880 = vmatpush1.bf16.msra.mxu0 0
        %881 = vmatprep.subr.bf16.mxu0 0
        %882 = vmatpush1.bf16.msra.mxu0 0
        %883 = vmatprep.subr.bf16.mxu0 0
        %884 = vmatpush1.bf16.msra.mxu0 0
        %885 = vmatprep.subr.bf16.mxu0 0
        %886 = vmatpush1.bf16.msra.mxu0 0
        %887 = vmatprep.mubr.bf16.mxu0 0
        %888 = vmatmul.mubr.bf16.gmra.mrb[0].mxu0 %v853
        %v889 = vpop.f32.mrb[0].mxu0
        %v890 = vadd.f32 0.0, %v889
        %v891 = vpop.f32.mrb[0].mxu0
        %v892 = vpop.f32.mrb[0].mxu0
        %v893 = vadd.f32 0.0, %v892
        %v894 = vpop.f32.mrb[0].mxu0
        %895 = vdwg.mxu0
        %v897 = vsel %vm256, %v761, 0
        %v900 = vsel %vm256, %v762, 0
        %v903 = vsel %vm256, %v763, 0
        %v906 = vsel %vm256, %v764, 0
        %908 = vmatprep.subr.bf16.mxu0 0
        %909 = vmatpush1.bf16.xpose.msra.mxu0 %v897
        %910 = vmatprep.subr.bf16.mxu0 0
        %911 = vmatpush1.bf16.xpose.msra.mxu0 %v900
        %912 = vmatprep.subr.bf16.mxu0 0
        %913 = vmatpush1.bf16.xpose.msra.mxu0 %v903
        %914 = vmatprep.subr.bf16.mxu0 0
        %915 = vmatpush1.bf16.xpose.msra.mxu0 %v906
        %916 = vmatprep.subr.bf16.mxu0 0
        %917 = vmatpush1.bf16.xpose.msra.mxu0 0
        %918 = vmatprep.subr.bf16.mxu0 0
        %919 = vmatpush1.bf16.xpose.msra.mxu0 0
        %920 = vmatprep.subr.bf16.mxu0 0
        %921 = vmatpush1.bf16.xpose.msra.mxu0 0
        %922 = vmatprep.subr.bf16.mxu0 0
        %923 = vmatpush1.bf16.xpose.msra.mxu0 0
        %924 = vmatprep.subr.bf16.mxu0 0
        %925 = vmatpush1.bf16.xpose.msra.mxu0 0
        %926 = vmatprep.subr.bf16.mxu0 0
        %927 = vmatpush1.bf16.xpose.msra.mxu0 0
        %928 = vmatprep.subr.bf16.mxu0 0
        %929 = vmatpush1.bf16.xpose.msra.mxu0 0
        %930 = vmatprep.subr.bf16.mxu0 0
        %931 = vmatpush1.bf16.xpose.msra.mxu0 0
        %932 = vmatprep.subr.bf16.mxu0 0
        %933 = vmatpush1.bf16.xpose.msra.mxu0 0
        %934 = vmatprep.subr.bf16.mxu0 0
        %935 = vmatpush1.bf16.xpose.msra.mxu0 0
        %936 = vmatprep.subr.bf16.mxu0 0
        %937 = vmatpush1.bf16.xpose.msra.mxu0 0
        %938 = vmatprep.subr.bf16.mxu0 0
        %939 = vmatpush1.bf16.xpose.msra.mxu0 0
        %940 = vmatprep.mubr.bf16.mxu0 0
        %941 = vmatmul.mubr.bf16.gmra.mrb[0].mxu0 %v774
        %v942 = vpop.f32.mrb[0].mxu0
        %v943 = vadd.f32 0.0, %v942
        %v944 = vpop.f32.mrb[0].mxu0
        %v945 = vpop.f32.mrb[0].mxu0
        %v946 = vadd.f32 0.0, %v945
        %v947 = vpop.f32.mrb[0].mxu0
        %948 = vdwg.mxu0
        %v949 = vsel %vm256, %v943, -inf
        %950 = vmax.xlane.f32.xlu0 %v949
        %v951 = vpop.xlane.xlu0 %950
        %v952 = vsel %vm256, %v946, -inf
        %953 = vmax.xlane.f32.xlu0 %v952
        %v954 = vpop.xlane.xlu0 %953
        %v955 = vsub.f32 %v943, %v951
        %v956 = vsub.f32 %v946, %v954
        %v957 = vmul.f32 %v955, 1.442695
        %v958 = vpow.pop %v957
        %v959 = vmul.f32 %v956, 1.442695
        %v960 = vpow.pop %v959
        %v961 = vsel %vm256, %v958, 0.0
        %962 = vadd.xlane.f32.xlu0 %v961
        %v963 = vpop.xlane.xlu0 %962
        %v964 = vsel %vm256, %v960, 0.0
        %965 = vadd.xlane.f32.xlu0 %v964
        %v966 = vpop.xlane.xlu0 %965
        %v967 = vrcp.pop %v963
        %v968 = vrcp.pop %v966
        %v969 = vmul.f32 %v958, %v967
        %v970 = vmul.f32 %v960, %v968
        %v971 = vpack.c.bf16 %v970, %v969
        %v973 = vsel %vm256, %v971, 0
        %975 = vmatprep.subr.bf16.mxu0 0
        %976 = vmatpush1.bf16.msra.mxu0 %v761
        %977 = vmatprep.subr.bf16.mxu0 0
        %978 = vmatpush1.bf16.msra.mxu0 %v762
        %979 = vmatprep.subr.bf16.mxu0 0
        %980 = vmatpush1.bf16.msra.mxu0 %v763
        %981 = vmatprep.subr.bf16.mxu0 0
        %982 = vmatpush1.bf16.msra.mxu0 %v764
        %983 = vmatprep.subr.bf16.mxu0 0
        %984 = vmatpush1.bf16.msra.mxu0 0
        %985 = vmatprep.subr.bf16.mxu0 0
        %986 = vmatpush1.bf16.msra.mxu0 0
        %987 = vmatprep.subr.bf16.mxu0 0
        %988 = vmatpush1.bf16.msra.mxu0 0
        %989 = vmatprep.subr.bf16.mxu0 0
        %990 = vmatpush1.bf16.msra.mxu0 0
        %991 = vmatprep.subr.bf16.mxu0 0
        %992 = vmatpush1.bf16.msra.mxu0 0
        %993 = vmatprep.subr.bf16.mxu0 0
        %994 = vmatpush1.bf16.msra.mxu0 0
        %995 = vmatprep.subr.bf16.mxu0 0
        %996 = vmatpush1.bf16.msra.mxu0 0
        %997 = vmatprep.subr.bf16.mxu0 0
        %998 = vmatpush1.bf16.msra.mxu0 0
        %999 = vmatprep.subr.bf16.mxu0 0
        %1000 = vmatpush1.bf16.msra.mxu0 0
        %1001 = vmatprep.subr.bf16.mxu0 0
        %1002 = vmatpush1.bf16.msra.mxu0 0
        %1003 = vmatprep.subr.bf16.mxu0 0
        %1004 = vmatpush1.bf16.msra.mxu0 0
        %1005 = vmatprep.subr.bf16.mxu0 0
        %1006 = vmatpush1.bf16.msra.mxu0 0
        %1007 = vmatprep.mubr.bf16.mxu0 0
        %1008 = vmatmul.mubr.bf16.gmra.mrb[0].mxu0 %v973
        %v1009 = vpop.f32.mrb[0].mxu0
        %v1010 = vadd.f32 0.0, %v1009
        %v1011 = vpop.f32.mrb[0].mxu0
        %v1012 = vpop.f32.mrb[0].mxu0
        %v1013 = vadd.f32 0.0, %v1012
        %v1014 = vpop.f32.mrb[0].mxu0
        %1015 = vdwg.mxu0
        %v1017 = vsel %vm256, %v765, 0
        %v1020 = vsel %vm256, %v766, 0
        %v1023 = vsel %vm256, %v767, 0
        %v1026 = vsel %vm256, %v768, 0
        %1028 = vmatprep.subr.bf16.mxu0 0
        %1029 = vmatpush1.bf16.xpose.msra.mxu0 %v1017
        %1030 = vmatprep.subr.bf16.mxu0 0
        %1031 = vmatpush1.bf16.xpose.msra.mxu0 %v1020
        %1032 = vmatprep.subr.bf16.mxu0 0
        %1033 = vmatpush1.bf16.xpose.msra.mxu0 %v1023
        %1034 = vmatprep.subr.bf16.mxu0 0
        %1035 = vmatpush1.bf16.xpose.msra.mxu0 %v1026
        %1036 = vmatprep.subr.bf16.mxu0 0
        %1037 = vmatpush1.bf16.xpose.msra.mxu0 0
        %1038 = vmatprep.subr.bf16.mxu0 0
        %1039 = vmatpush1.bf16.xpose.msra.mxu0 0
        %1040 = vmatprep.subr.bf16.mxu0 0
        %1041 = vmatpush1.bf16.xpose.msra.mxu0 0
        %1042 = vmatprep.subr.bf16.mxu0 0
        %1043 = vmatpush1.bf16.xpose.msra.mxu0 0
        %1044 = vmatprep.subr.bf16.mxu0 0
        %1045 = vmatpush1.bf16.xpose.msra.mxu0 0
        %1046 = vmatprep.subr.bf16.mxu0 0
        %1047 = vmatpush1.bf16.xpose.msra.mxu0 0
        %1048 = vmatprep.subr.bf16.mxu0 0
        %1049 = vmatpush1.bf16.xpose.msra.mxu0 0
        %1050 = vmatprep.subr.bf16.mxu0 0
        %1051 = vmatpush1.bf16.xpose.msra.mxu0 0
        %1052 = vmatprep.subr.bf16.mxu0 0
        %1053 = vmatpush1.bf16.xpose.msra.mxu0 0
        %1054 = vmatprep.subr.bf16.mxu0 0
        %1055 = vmatpush1.bf16.xpose.msra.mxu0 0
        %1056 = vmatprep.subr.bf16.mxu0 0
        %1057 = vmatpush1.bf16.xpose.msra.mxu0 0
        %1058 = vmatprep.subr.bf16.mxu0 0
        %1059 = vmatpush1.bf16.xpose.msra.mxu0 0
        %1060 = vmatprep.mubr.bf16.mxu0 0
        %1061 = vmatmul.mubr.bf16.gmra.mrb[0].mxu0 %v774
        %v1062 = vpop.f32.mrb[0].mxu0
        %v1063 = vadd.f32 0.0, %v1062
        %v1064 = vpop.f32.mrb[0].mxu0
        %v1065 = vpop.f32.mrb[0].mxu0
        %v1066 = vadd.f32 0.0, %v1065
        %v1067 = vpop.f32.mrb[0].mxu0
        %1068 = vdwg.mxu0
        %v1069 = vsel %vm256, %v1063, -inf
        %1070 = vmax.xlane.f32.xlu0 %v1069
        %v1071 = vpop.xlane.xlu0 %1070
        %v1072 = vsel %vm256, %v1066, -inf
        %1073 = vmax.xlane.f32.xlu0 %v1072
        %v1074 = vpop.xlane.xlu0 %1073
        %v1075 = vsub.f32 %v1063, %v1071
        %v1076 = vsub.f32 %v1066, %v1074
        %v1077 = vmul.f32 %v1075, 1.442695
        %v1078 = vpow.pop %v1077
        %v1079 = vmul.f32 %v1076, 1.442695
        %v1080 = vpow.pop %v1079
        %v1081 = vsel %vm256, %v1078, 0.0
        %1082 = vadd.xlane.f32.xlu0 %v1081
        %v1083 = vpop.xlane.xlu0 %1082
        %v1084 = vsel %vm256, %v1080, 0.0
        %1085 = vadd.xlane.f32.xlu0 %v1084
        %v1086 = vpop.xlane.xlu0 %1085
        %v1087 = vrcp.pop %v1083
        %v1088 = vrcp.pop %v1086
        %v1089 = vmul.f32 %v1078, %v1087
        %v1090 = vmul.f32 %v1080, %v1088
        %v1091 = vpack.c.bf16 %v1090, %v1089
        %v1093 = vsel %vm256, %v1091, 0
        %1095 = vmatprep.subr.bf16.mxu0 0
        %1096 = vmatpush1.bf16.msra.mxu0 %v765
        %1097 = vmatprep.subr.bf16.mxu0 0
        %1098 = vmatpush1.bf16.msra.mxu0 %v766
        %1099 = vmatprep.subr.bf16.mxu0 0
        %1100 = vmatpush1.bf16.msra.mxu0 %v767
        %1101 = vmatprep.subr.bf16.mxu0 0
        %1102 = vmatpush1.bf16.msra.mxu0 %v768
        %1103 = vmatprep.subr.bf16.mxu0 0
        %1104 = vmatpush1.bf16.msra.mxu0 0
        %1105 = vmatprep.subr.bf16.mxu0 0
        %1106 = vmatpush1.bf16.msra.mxu0 0
        %1107 = vmatprep.subr.bf16.mxu0 0
        %1108 = vmatpush1.bf16.msra.mxu0 0
        %1109 = vmatprep.subr.bf16.mxu0 0
        %1110 = vmatpush1.bf16.msra.mxu0 0
        %1111 = vmatprep.subr.bf16.mxu0 0
        %1112 = vmatpush1.bf16.msra.mxu0 0
        %1113 = vmatprep.subr.bf16.mxu0 0
        %1114 = vmatpush1.bf16.msra.mxu0 0
        %1115 = vmatprep.subr.bf16.mxu0 0
        %1116 = vmatpush1.bf16.msra.mxu0 0
        %1117 = vmatprep.subr.bf16.mxu0 0
        %1118 = vmatpush1.bf16.msra.mxu0 0
        %1119 = vmatprep.subr.bf16.mxu0 0
        %1120 = vmatpush1.bf16.msra.mxu0 0
        %1121 = vmatprep.subr.bf16.mxu0 0
        %1122 = vmatpush1.bf16.msra.mxu0 0
        %1123 = vmatprep.subr.bf16.mxu0 0
        %1124 = vmatpush1.bf16.msra.mxu0 0
        %1125 = vmatprep.subr.bf16.mxu0 0
        %1126 = vmatpush1.bf16.msra.mxu0 0
        %1127 = vmatprep.mubr.bf16.mxu0 0
        %1128 = vmatmul.mubr.bf16.gmra.mrb[0].mxu0 %v1093
        %v1129 = vpop.f32.mrb[0].mxu0
        %v1130 = vadd.f32 0.0, %v1129
        %v1131 = vpop.f32.mrb[0].mxu0
        %v1132 = vpop.f32.mrb[0].mxu0
        %v1133 = vadd.f32 0.0, %v1132
        %v1134 = vpop.f32.mrb[0].mxu0
        %1135 = vdwg.mxu0
        %v1137 = vsel %vm256, %v769, 0
        %v1140 = vsel %vm256, %v770, 0
        %v1143 = vsel %vm256, %v771, 0
        %v1146 = vsel %vm256, %v772, 0
        %1148 = vmatprep.subr.bf16.mxu0 0
        %1149 = vmatpush1.bf16.xpose.msra.mxu0 %v1137
        %1150 = vmatprep.subr.bf16.mxu0 0
        %1151 = vmatpush1.bf16.xpose.msra.mxu0 %v1140
        %1152 = vmatprep.subr.bf16.mxu0 0
        %1153 = vmatpush1.bf16.xpose.msra.mxu0 %v1143
        %1154 = vmatprep.subr.bf16.mxu0 0
        %1155 = vmatpush1.bf16.xpose.msra.mxu0 %v1146
        %1156 = vmatprep.subr.bf16.mxu0 0
        %1157 = vmatpush1.bf16.xpose.msra.mxu0 0
        %1158 = vmatprep.subr.bf16.mxu0 0
        %1159 = vmatpush1.bf16.xpose.msra.mxu0 0
        %1160 = vmatprep.subr.bf16.mxu0 0
        %1161 = vmatpush1.bf16.xpose.msra.mxu0 0
        %1162 = vmatprep.subr.bf16.mxu0 0
        %1163 = vmatpush1.bf16.xpose.msra.mxu0 0
        %1164 = vmatprep.subr.bf16.mxu0 0
        %1165 = vmatpush1.bf16.xpose.msra.mxu0 0
        %1166 = vmatprep.subr.bf16.mxu0 0
        %1167 = vmatpush1.bf16.xpose.msra.mxu0 0
        %1168 = vmatprep.subr.bf16.mxu0 0
        %1169 = vmatpush1.bf16.xpose.msra.mxu0 0
        %1170 = vmatprep.subr.bf16.mxu0 0
        %1171 = vmatpush1.bf16.xpose.msra.mxu0 0
        %1172 = vmatprep.subr.bf16.mxu0 0
        %1173 = vmatpush1.bf16.xpose.msra.mxu0 0
        %1174 = vmatprep.subr.bf16.mxu0 0
        %1175 = vmatpush1.bf16.xpose.msra.mxu0 0
        %1176 = vmatprep.subr.bf16.mxu0 0
        %1177 = vmatpush1.bf16.xpose.msra.mxu0 0
        %1178 = vmatprep.subr.bf16.mxu0 0
        %1179 = vmatpush1.bf16.xpose.msra.mxu0 0
        %1180 = vmatprep.mubr.bf16.mxu0 0
        %1181 = vmatmul.mubr.bf16.gmra.mrb[0].mxu0 %v774
        %v1182 = vpop.f32.mrb[0].mxu0
        %v1183 = vadd.f32 0.0, %v1182
        %v1184 = vpop.f32.mrb[0].mxu0
        %v1185 = vpop.f32.mrb[0].mxu0
        %v1186 = vadd.f32 0.0, %v1185
        %v1187 = vpop.f32.mrb[0].mxu0
        %1188 = vdwg.mxu0
        %v1189 = vsel %vm256, %v1183, -inf
        %1190 = vmax.xlane.f32.xlu0 %v1189
        %v1191 = vpop.xlane.xlu0 %1190
        %v1192 = vsel %vm256, %v1186, -inf
        %1193 = vmax.xlane.f32.xlu0 %v1192
        %v1194 = vpop.xlane.xlu0 %1193
        %v1195 = vsub.f32 %v1183, %v1191
        %v1196 = vsub.f32 %v1186, %v1194
        %v1197 = vmul.f32 %v1195, 1.442695
        %v1198 = vpow.pop %v1197
        %v1199 = vmul.f32 %v1196, 1.442695
        %v1200 = vpow.pop %v1199
        %v1201 = vsel %vm256, %v1198, 0.0
        %1202 = vadd.xlane.f32.xlu0 %v1201
        %v1203 = vpop.xlane.xlu0 %1202
        %v1204 = vsel %vm256, %v1200, 0.0
        %1205 = vadd.xlane.f32.xlu0 %v1204
        %v1206 = vpop.xlane.xlu0 %1205
        %v1207 = vrcp.pop %v1203
        %v1208 = vrcp.pop %v1206
        %v1209 = vmul.f32 %v1198, %v1207
        %v1210 = vmul.f32 %v1200, %v1208
        %v1211 = vpack.c.bf16 %v1210, %v1209
        %v1213 = vsel %vm256, %v1211, 0
        %1215 = vmatprep.subr.bf16.mxu0 0
        %1216 = vmatpush1.bf16.msra.mxu0 %v769
        %1217 = vmatprep.subr.bf16.mxu0 0
        %1218 = vmatpush1.bf16.msra.mxu0 %v770
        %1219 = vmatprep.subr.bf16.mxu0 0
        %1220 = vmatpush1.bf16.msra.mxu0 %v771
        %1221 = vmatprep.subr.bf16.mxu0 0
        %1222 = vmatpush1.bf16.msra.mxu0 %v772
        %1223 = vmatprep.subr.bf16.mxu0 0
        %1224 = vmatpush1.bf16.msra.mxu0 0
        %1225 = vmatprep.subr.bf16.mxu0 0
        %1226 = vmatpush1.bf16.msra.mxu0 0
        %1227 = vmatprep.subr.bf16.mxu0 0
        %1228 = vmatpush1.bf16.msra.mxu0 0
        %1229 = vmatprep.subr.bf16.mxu0 0
        %1230 = vmatpush1.bf16.msra.mxu0 0
        %1231 = vmatprep.subr.bf16.mxu0 0
        %1232 = vmatpush1.bf16.msra.mxu0 0
        %1233 = vmatprep.subr.bf16.mxu0 0
        %1234 = vmatpush1.bf16.msra.mxu0 0
        %1235 = vmatprep.subr.bf16.mxu0 0
        %1236 = vmatpush1.bf16.msra.mxu0 0
        %1237 = vmatprep.subr.bf16.mxu0 0
        %1238 = vmatpush1.bf16.msra.mxu0 0
        %1239 = vmatprep.subr.bf16.mxu0 0
        %1240 = vmatpush1.bf16.msra.mxu0 0
        %1241 = vmatprep.subr.bf16.mxu0 0
        %1242 = vmatpush1.bf16.msra.mxu0 0
        %1243 = vmatprep.subr.bf16.mxu0 0
        %1244 = vmatpush1.bf16.msra.mxu0 0
        %1245 = vmatprep.subr.bf16.mxu0 0
        %1246 = vmatpush1.bf16.msra.mxu0 0
        %1247 = vmatprep.mubr.bf16.mxu0 0
        %1248 = vmatmul.mubr.bf16.gmra.mrb[0].mxu0 %v1213
        %v1249 = vpop.f32.mrb[0].mxu0
        %v1250 = vadd.f32 0.0, %v1249
        %v1251 = vpop.f32.mrb[0].mxu0
        %v1252 = vpop.f32.mrb[0].mxu0
        %v1253 = vadd.f32 0.0, %v1252
        %v1254 = vpop.f32.mrb[0].mxu0
        %1255 = vdwg.mxu0
        %v1256 = vpack.c.bf16 %v893, %v890
        %v1257 = vpack.c.bf16 %v1013, %v1010
        %v1258 = vpack.c.bf16 %v1133, %v1130
        %v1259 = vpack.c.bf16 %v1253, %v1250
        %v1260 = vld [vmem:[%s4] sm:$0xff]
        %v1261 = vld [vmem:[%s4 + $0x8] sm:$0xff]
        %v1262 = vld [vmem:[%s4 + $0x10] sm:$0xff]
        %v1263 = vld [vmem:[%s4 + $0x18] sm:$0xff]
        %v1264 = vld [vmem:[%s4 + $0x20] sm:$0xff]
        %v1265 = vld [vmem:[%s4 + $0x28] sm:$0xff]
        %v1266 = vld [vmem:[%s4 + $0x30] sm:$0xff]
        %v1267 = vld [vmem:[%s4 + $0x38] sm:$0xff]
        %v1268 = vpack.c.bf16 %v1261, %v1260
        %v1269 = vpack.c.bf16 %v1263, %v1262
        %v1270 = vpack.c.bf16 %v1265, %v1264
        %v1271 = vpack.c.bf16 %v1267, %v1266
        %v1273 = vsel %vm256, %v1256, 0
        %v1276 = vsel %vm256, %v1257, 0
        %v1279 = vsel %vm256, %v1258, 0
        %v1282 = vsel %vm256, %v1259, 0
        %1284 = vmatprep.subr.bf16.mxu0 0
        %1285 = vmatpush1.bf16.msra.mxu0 %v1268
        %1286 = vmatprep.subr.bf16.mxu0 0
        %1287 = vmatpush1.bf16.msra.mxu0 %v1269
        %1288 = vmatprep.subr.bf16.mxu0 0
        %1289 = vmatpush1.bf16.msra.mxu0 %v1270
        %1290 = vmatprep.subr.bf16.mxu0 0
        %1291 = vmatpush1.bf16.msra.mxu0 %v1271
        %1292 = vmatprep.subr.bf16.mxu0 0
        %1293 = vmatpush1.bf16.msra.mxu0 0
        %1294 = vmatprep.subr.bf16.mxu0 0
        %1295 = vmatpush1.bf16.msra.mxu0 0
        %1296 = vmatprep.subr.bf16.mxu0 0
        %1297 = vmatpush1.bf16.msra.mxu0 0
        %1298 = vmatprep.subr.bf16.mxu0 0
        %1299 = vmatpush1.bf16.msra.mxu0 0
        %1300 = vmatprep.subr.bf16.mxu0 0
        %1301 = vmatpush1.bf16.msra.mxu0 0
        %1302 = vmatprep.subr.bf16.mxu0 0
        %1303 = vmatpush1.bf16.msra.mxu0 0
        %1304 = vmatprep.subr.bf16.mxu0 0
        %1305 = vmatpush1.bf16.msra.mxu0 0
        %1306 = vmatprep.subr.bf16.mxu0 0
        %1307 = vmatpush1.bf16.msra.mxu0 0
        %1308 = vmatprep.subr.bf16.mxu0 0
        %1309 = vmatpush1.bf16.msra.mxu0 0
        %1310 = vmatprep.subr.bf16.mxu0 0
        %1311 = vmatpush1.bf16.msra.mxu0 0
        %1312 = vmatprep.subr.bf16.mxu0 0
        %1313 = vmatpush1.bf16.msra.mxu0 0
        %1314 = vmatprep.subr.bf16.mxu0 0
        %1315 = vmatpush1.bf16.msra.mxu0 0
        %1316 = vmatprep.mubr.bf16.mxu0 0
        %1317 = vmatmul.mubr.bf16.gmra.mrb[0].mxu0 %v1273
        %v1318 = vpop.f32.mrb[0].mxu0
        %v1319 = vadd.f32 0.0, %v1318
        %v1320 = vpop.f32.mrb[0].mxu0
        %v1321 = vpop.f32.mrb[0].mxu0
        %v1322 = vadd.f32 0.0, %v1321
        %v1323 = vpop.f32.mrb[0].mxu0
        %1324 = vmatprep.mubr.bf16.mxu0 0
        %1325 = vmatmul.mubr.bf16.gmra.mrb[0].mxu0 %v1276
        %v1326 = vpop.f32.mrb[0].mxu0
        %v1327 = vadd.f32 0.0, %v1326
        %v1328 = vpop.f32.mrb[0].mxu0
        %v1329 = vpop.f32.mrb[0].mxu0
        %v1330 = vadd.f32 0.0, %v1329
        %v1331 = vpop.f32.mrb[0].mxu0
        %1332 = vmatprep.mubr.bf16.mxu0 0
        %1333 = vmatmul.mubr.bf16.gmra.mrb[0].mxu0 %v1279
        %v1334 = vpop.f32.mrb[0].mxu0
        %v1335 = vadd.f32 0.0, %v1334
        %v1336 = vpop.f32.mrb[0].mxu0
        %v1337 = vpop.f32.mrb[0].mxu0
        %v1338 = vadd.f32 0.0, %v1337
        %v1339 = vpop.f32.mrb[0].mxu0
        %1340 = vmatprep.mubr.bf16.mxu0 0
        %1341 = vmatmul.mubr.bf16.gmra.mrb[0].mxu0 %v1282
        %v1342 = vpop.f32.mrb[0].mxu0
        %v1343 = vadd.f32 0.0, %v1342
        %v1344 = vpop.f32.mrb[0].mxu0
        %v1345 = vpop.f32.mrb[0].mxu0
        %v1346 = vadd.f32 0.0, %v1345
        %v1347 = vpop.f32.mrb[0].mxu0
        %1348 = vdwg.mxu0
        %1349 = vst [vmem:[%s217] sm:$0xff] %v1319
        %1350 = vst [vmem:[%s217 + $0x8] sm:$0xff] %v1322
        %1351 = vst [vmem:[%s217 + $0x10] sm:$0xff] %v1327
        %1352 = vst [vmem:[%s217 + $0x18] sm:$0xff] %v1330
        %1353 = vst [vmem:[%s217 + $0x20] sm:$0xff] %v1335
        %1354 = vst [vmem:[%s217 + $0x28] sm:$0xff] %v1338
        %1355 = vst [vmem:[%s217 + $0x30] sm:$0xff] %v1343
        %1356 = vst [vmem:[%s217 + $0x38] sm:$0xff] %v1346
        %s1357 = sand.u32 %s137, 1
        %s1358 = scalar_lea.sflag [#allocation3], %s1357
        %s1359 = sand.u32 %s137, 1
        %s1360 = smul.addr %s1359, 64
        %s1361 = scalar_lea.vmem [#allocation2], %s1360
        // Predicated region
        $region41: #{tpu_custom_call.1} parent=39 // pred_check
          %p1362 = pneg %p147
        $region42: #{tpu_custom_call.1} parent=39 // pred_check_branch
          %1364 = sbr.rel (%p1362) target = $region44
        $region43: #{tpu_custom_call.1} parent=39 // pred_region
          %s1366 = ssub.s32 1024, 1024
          %1367 = vsyncadd %s1358, %s1366
          %s1368 = smul.addr %s19, 8
          %s1369 = smul.addr %s1368, 128
          %s1370 = scalar_lea.hbm %s5, %s1369
          %s1371 = sshll.u32 %s1361, 4
          %s1372 = int_to_ptr.vmem [resolvable:$true] %s1371
          %1377 = dma.vmem_to_hbm [thread:$0]  %s1372, 1024, %s1370, %s1358, 128, 128, 8
        $region44: #{tpu_custom_call.1} parent=39 // pred_fallthru
          _
      $region40: #{tpu_custom_call.1} parent=5 // pred_fallthru
        _
      %p1378 = scmp.le.s32.totalorder 2, %s14
      // Predicated region
      $region45: #{tpu_custom_call.1} parent=5 // pred_check
        %p1379 = pneg %p1378
      $region46: #{tpu_custom_call.1} parent=5 // pred_check_branch
        %1381 = sbr.rel (%p1379) target = $region48
      $region47: #{tpu_custom_call.1} parent=5 // pred_region
        %s1382 = ssub.s32 %s14, 2
        // Predicated region
        $region49: #{tpu_custom_call.1} parent=47 // pred_check
          %p1383 = pneg %p153
        $region50: #{tpu_custom_call.1} parent=47 // pred_check_branch
          %1385 = sbr.rel (%p1383) target = $region52
        $region51: #{tpu_custom_call.1} parent=47 // pred_region
          %s1386 = sand.u32 %s138, 1
          %s1387 = scalar_lea.sflag [#allocation3], %s1386
          %s1388 = sand.u32 %s138, 1
          %s1389 = smul.addr %s1388, 64
          %s1390 = scalar_lea.vmem [#allocation2], %s1389
          %1391 = dma.done %s1387, 1024
        $region52: #{tpu_custom_call.1} parent=47 // pred_fallthru
          _
      $region48: #{tpu_custom_call.1} parent=5 // pred_fallthru
        _
    $region6: #{tpu_custom_call.1} parent=1 // loop_footer
      %s18 = sadd.s32 1, %s14
    $region7: #{tpu_custom_call.1} parent=1 // loop_footer_branch
      %13 = sbr.rel target = $region3
    $region8: #{tpu_custom_call.1} parent=1 // loop_exit
      _
    %1392 = vsyncpa [#allocation3], 1
    %s1393 = scalar_lea.sflag [#allocation3], 1
    %1394 = vsyncpa %s1393, 1

</llo_original>
